<compile_context>
chip_gen: v7x
topology: tpu7x:2x2x1
jax: 0.10.0
libtpu: 0.0.40
codegen_flags: <defaults>
</compile_context>

<pallas_src>
import jax
import jax.numpy as jnp
from jax.experimental import pallas as pl
from jax.experimental.pallas import tpu as pltpu

# ----- small, module-consistent configuration -----
EMBED_DIM = 32              # embedding_dim
NUM_HEADS = 4               # num_heads
HEAD_DIM = EMBED_DIM // NUM_HEADS
HIDDEN_DIM = 64             # hidden_dim
DOWN_DIM = EMBED_DIM // 2   # down_embedding_dim = int(embedding_dim * 0.5)
SEQ_LEN = 8
BATCH = 2
NL = SEQ_LEN * BATCH        # fused M dimension (rows ordered (l, n))
LN_EPS = 1e-5

# ----- layout of the single packed constants slab (rows x 128 lanes, f32) -----
# Multi-row blocks first (8-sublane-aligned, lane offset 0), 1-row vectors at the end.
ROW_WQKV = 0                              # (EMBED_DIM, 3*EMBED_DIM)  = Wqkv^T (Q third scaled)
ROW_WO = ROW_WQKV + EMBED_DIM             # (EMBED_DIM, EMBED_DIM)    = Wo^T
ROW_W1 = ROW_WO + EMBED_DIM               # (EMBED_DIM, HIDDEN_DIM)   = w1^T
ROW_W2 = ROW_W1 + EMBED_DIM               # (HIDDEN_DIM, DOWN_DIM)    = w2^T
ROW_W3 = ROW_W2 + HIDDEN_DIM              # (DOWN_DIM, DOWN_DIM)      = w3^T
ROW_MASK = ROW_W3 + DOWN_DIM              # (NL, NL) additive batch-separation mask
ROW_BQKV = ROW_MASK + NL                  # single-row vectors:
ROW_BO = ROW_BQKV + 1
ROW_B1 = ROW_BO + 1
ROW_B2 = ROW_B1 + 1
ROW_B3 = ROW_B2 + 1
ROW_G1 = ROW_B3 + 1
ROW_BE1 = ROW_G1 + 1
ROW_G2 = ROW_BE1 + 1
ROW_BE2 = ROW_G2 + 1
SLAB_ROWS = ((ROW_BE2 + 1 + 7) // 8) * 8  # pad to a multiple of 8 sublanes (= 208)
SLAB_COLS = 128                           # lane-dense slab (free: 64-wide already pads to 128)


def _layer_norm(x, gamma, beta):
    # Single-pass variance: E[x^2] - mu^2 (the two reductions are independent).
    mu = jnp.mean(x, axis=-1, keepdims=True)
    var = jnp.mean(x * x, axis=-1, keepdims=True) - mu * mu
    return (x - mu) * jax.lax.rsqrt(var + LN_EPS) * gamma + beta


def sent_mha_kernel(x_ref, slab_ref, o_ref):
    x = x_ref[...]                                                    # (NL, E), rows = (l, n)

    # ----- fused QKV projection: ONE lane-dense matmul (scale pre-folded into Q) -----
    wqkv_t = slab_ref[ROW_WQKV:ROW_WQKV + EMBED_DIM, 0:3 * EMBED_DIM]     # (32, 96)
    bqkv = slab_ref[ROW_BQKV:ROW_BQKV + 1, 0:3 * EMBED_DIM]               # (1, 96)
    qkv = jnp.dot(x, wqkv_t, preferred_element_type=jnp.float32) + bqkv   # (NL, 96)

    mask = slab_ref[ROW_MASK:ROW_MASK + NL, 0:NL]                         # (NL, NL), -1e30 off-batch

    # ----- per-head attention; head splits are in-vreg lane slices (XLU), not VMEM copies -----
    ctx_parts = []
    for h in range(NUM_HEADS):
        q_h = qkv[:, h * HEAD_DIM:(h + 1) * HEAD_DIM]                                   # (NL, d)
        k_h = qkv[:, EMBED_DIM + h * HEAD_DIM:EMBED_DIM + (h + 1) * HEAD_DIM]           # (NL, d)
        v_h = qkv[:, 2 * EMBED_DIM + h * HEAD_DIM:2 * EMBED_DIM + (h + 1) * HEAD_DIM]   # (NL, d)
        s = jax.lax.dot_general(q_h, k_h, (((1,), (1,)), ((), ())),
                                preferred_element_type=jnp.float32)       # (NL, NL)
        s = s + mask
        s = s - jnp.max(s, axis=-1, keepdims=True)
        p = jnp.exp(s)
        p = p * pl.reciprocal(jnp.sum(p, axis=-1, keepdims=True), approx=True)
        ctx_parts.append(jnp.dot(p, v_h, preferred_element_type=jnp.float32))           # (NL, d)

    # ----- fused output projection: lane-concat ctx to (NL, E), ONE matmul -----
    ctx = jnp.concatenate(ctx_parts, axis=-1)                              # (NL, E)
    wo_t = slab_ref[ROW_WO:ROW_WO + EMBED_DIM, 0:EMBED_DIM]                # (E, E)
    attn = jnp.dot(ctx, wo_t, preferred_element_type=jnp.float32) \
        + slab_ref[ROW_BO:ROW_BO + 1, 0:EMBED_DIM]                         # (NL, E)

    # ----- layerNorm1(attn_output + x) -----
    # TODO(synk): reference declares LayerNorm1 over down_embedding_dim but applies it to an
    # embedding_dim-sized tensor (shape-inconsistent in PyTorch); normalize over embedding_dim.
    h1 = _layer_norm(attn + x,
                     slab_ref[ROW_G1:ROW_G1 + 1, 0:EMBED_DIM],
                     slab_ref[ROW_BE1:ROW_BE1 + 1, 0:EMBED_DIM])

    # ----- ffnn: Linear -> ReLU -> Linear -> ReLU (weights pre-transposed host-side) -----
    f = jnp.maximum(
        jnp.dot(h1, slab_ref[ROW_W1:ROW_W1 + EMBED_DIM, 0:HIDDEN_DIM],
                preferred_element_type=jnp.float32)
        + slab_ref[ROW_B1:ROW_B1 + 1, 0:HIDDEN_DIM], 0.0)                  # (NL, HID)
    f2 = jnp.maximum(
        jnp.dot(f, slab_ref[ROW_W2:ROW_W2 + HIDDEN_DIM, 0:DOWN_DIM],
                preferred_element_type=jnp.float32)
        + slab_ref[ROW_B2:ROW_B2 + 1, 0:DOWN_DIM], 0.0)                    # (NL, D)

    # ----- linear -----
    lin = jnp.dot(f2, slab_ref[ROW_W3:ROW_W3 + DOWN_DIM, 0:DOWN_DIM],
                  preferred_element_type=jnp.float32) \
        + slab_ref[ROW_B3:ROW_B3 + 1, 0:DOWN_DIM]                          # (NL, D)

    # ----- layerNorm2(x + attn_output) -----
    # TODO(synk): reference adds full attn_output (dim E) to x (dim D=E/2), shape-incompatible
    # in PyTorch; we add the first D features of attn_output (matches the JAX reference below).
    res2 = lin + attn[:, :DOWN_DIM]
    out = _layer_norm(res2,
                      slab_ref[ROW_G2:ROW_G2 + 1, 0:DOWN_DIM],
                      slab_ref[ROW_BE2:ROW_BE2 + 1, 0:DOWN_DIM])           # (NL, D)

    # (16,16) masked store is cheap at this size; lane-dense repack would cost more than it saves.
    o_ref[...] = out.astype(o_ref.dtype)


def pack_params(params):
    """PyTorch-style params -> ONE packed 128-lane constants slab (single DMA)."""
    (wqkv, bqkv, wo, bo, w1, b1, w2, b2, w3, b3, g1, be1, g2, be2) = params
    scale = 1.0 / (HEAD_DIM ** 0.5)

    # Wqkv^T (E, 3E) with the softmax scale folded into the Q third (weights AND bias).
    wqkv_t = jnp.transpose(wqkv, (1, 0))                      # (E, 3E)
    wqkv_t = wqkv_t.at[:, :EMBED_DIM].multiply(scale)
    bqkv_row = bqkv.reshape(-1)                               # (3E,)
    bqkv_row = bqkv_row.at[:EMBED_DIM].multiply(scale)

    slab = jnp.zeros((SLAB_ROWS, SLAB_COLS), jnp.float32)
    slab = slab.at[ROW_WQKV:ROW_WQKV + EMBED_DIM, :3 * EMBED_DIM].set(wqkv_t)
    slab = slab.at[ROW_WO:ROW_WO + EMBED_DIM, :EMBED_DIM].set(wo.T)
    slab = slab.at[ROW_W1:ROW_W1 + EMBED_DIM, :HIDDEN_DIM].set(w1.T)
    slab = slab.at[ROW_W2:ROW_W2 + HIDDEN_DIM, :DOWN_DIM].set(w2.T)
    slab = slab.at[ROW_W3:ROW_W3 + DOWN_DIM, :DOWN_DIM].set(w3.T)
    slab = slab.at[ROW_BQKV, :3 * EMBED_DIM].set(bqkv_row)
    slab = slab.at[ROW_BO, :EMBED_DIM].set(bo.reshape(-1))
    slab = slab.at[ROW_B1, :HIDDEN_DIM].set(b1.reshape(-1))
    slab = slab.at[ROW_B2, :DOWN_DIM].set(b2.reshape(-1))
    slab = slab.at[ROW_B3, :DOWN_DIM].set(b3.reshape(-1))
    slab = slab.at[ROW_G1, :EMBED_DIM].set(g1.reshape(-1))
    slab = slab.at[ROW_BE1, :EMBED_DIM].set(be1.reshape(-1))
    slab = slab.at[ROW_G2, :DOWN_DIM].set(g2.reshape(-1))
    slab = slab.at[ROW_BE2, :DOWN_DIM].set(be2.reshape(-1))

    # Additive mask: flat rows are (l, n)-ordered, so batch id of row r is r % BATCH;
    # queries may only attend to keys of the same batch element.
    row_batch = jnp.arange(NL) % BATCH
    neg = jnp.where(row_batch[:, None] == row_batch[None, :], 0.0, -1e30).astype(jnp.float32)
    slab = slab.at[ROW_MASK:ROW_MASK + NL, :NL].set(neg)
    return slab


def sent_mha_forward(x, slab):
    """x: (L, N, E) float32 -> (L, N, DOWN_DIM) float32."""
    L, N, E = x.shape
    x2 = x.reshape(L * N, E)                       # free reshape; rows ordered (l, n)

    # Rough advisory cost for XLA scheduling of neighbors (does not change kernel time).
    flops = (2 * NL * EMBED_DIM * 3 * EMBED_DIM          # fused QKV
             + 2 * NUM_HEADS * 2 * NL * NL * HEAD_DIM    # scores + ctx
             + 2 * NL * EMBED_DIM * EMBED_DIM            # output projection
             + 2 * NL * EMBED_DIM * HIDDEN_DIM           # ffn1
             + 2 * NL * HIDDEN_DIM * DOWN_DIM            # ffn2
             + 2 * NL * DOWN_DIM * DOWN_DIM)             # linear
    cost = pl.CostEstimate(
        flops=flops,
        transcendentals=NUM_HEADS * NL * NL + 6 * NL,
        bytes_accessed=4 * (NL * EMBED_DIM + SLAB_ROWS * SLAB_COLS + NL * DOWN_DIM))

    vmem = pltpu.MemorySpace.VMEM
    out = pl.pallas_call(
        sent_mha_kernel,
        out_shape=jax.ShapeDtypeStruct((L * N, DOWN_DIM), jnp.float32),
        in_specs=[pl.BlockSpec(memory_space=vmem)] * 2,
        out_specs=pl.BlockSpec(memory_space=vmem),
        cost_estimate=cost,
    )(x2, slab)
    return out.reshape(L, N, DOWN_DIM)             # free reshape back to (L, N, D)


def _reference(x, params):
    """Pure-JAX reference mirroring the kernel math (for a sanity check)."""
    (wqkv, bqkv, wo, bo, w1, b1, w2, b2, w3, b3, g1, be1, g2, be2) = params

    def ln(v, gamma, beta):
        mu = jnp.mean(v, axis=-1, keepdims=True)
        var = jnp.mean((v - mu) ** 2, axis=-1, keepdims=True)
        return (v - mu) * jax.lax.rsqrt(var + LN_EPS) * gamma + beta

    def per_batch(xb):                              # xb: (L, E)
        qkv = xb @ wqkv.T + bqkv
        q, k, v = qkv[:, :EMBED_DIM], qkv[:, EMBED_DIM:2 * EMBED_DIM], qkv[:, 2 * EMBED_DIM:]
        scale = 1.0 / (HEAD_DIM ** 0.5)
        parts = []
        for h in range(NUM_HEADS):
            sl = slice(h * HEAD_DIM, (h + 1) * HEAD_DIM)
            s = (q[:, sl] * scale) @ k[:, sl].T
            p = jax.nn.softmax(s, axis=-1)
            parts.append(p @ v[:, sl])
        attn_out = jnp.concatenate(parts, axis=-1) @ wo.T + bo
        h1 = ln(attn_out + xb, g1, be1)
        f = jax.nn.relu(h1 @ w1.T + b1)
        f2 = jax.nn.relu(f @ w2.T + b2)
        lin = f2 @ w3.T + b3
        return ln(lin + attn_out[:, :DOWN_DIM], g2, be2)

    return jnp.stack([per_batch(x[:, n]) for n in range(x.shape[1])], axis=1)


def make_params(key):
    ks = jax.random.split(key, 14)
    rnd = lambda k, shp, s=0.1: jax.random.normal(k, shp, dtype=jnp.float32) * s
    wqkv = rnd(ks[0], (3 * EMBED_DIM, EMBED_DIM))
    bqkv = rnd(ks[1], (1, 3 * EMBED_DIM))
    wo = rnd(ks[2], (EMBED_DIM, EMBED_DIM))
    bo = rnd(ks[3], (1, EMBED_DIM))
    w1 = rnd(ks[4], (HIDDEN_DIM, EMBED_DIM))
    b1 = rnd(ks[5], (1, HIDDEN_DIM))
    w2 = rnd(ks[6], (DOWN_DIM, HIDDEN_DIM))
    b2 = rnd(ks[7], (1, DOWN_DIM))
    w3 = rnd(ks[8], (DOWN_DIM, DOWN_DIM))
    b3 = rnd(ks[9], (1, DOWN_DIM))
    g1 = 1.0 + rnd(ks[10], (1, EMBED_DIM))
    be1 = rnd(ks[11], (1, EMBED_DIM))
    g2 = 1.0 + rnd(ks[12], (1, DOWN_DIM))
    be2 = rnd(ks[13], (1, DOWN_DIM))
    return (wqkv, bqkv, wo, bo, w1, b1, w2, b2, w3, b3, g1, be1, g2, be2)


if __name__ == "__main__":
    key = jax.random.PRNGKey(0)
    kx, kp = jax.random.split(key)
    x = jax.random.normal(kx, (SEQ_LEN, BATCH, EMBED_DIM), dtype=jnp.float32)
    params = make_params(kp)
    slab = pack_params(params)

    fwd = jax.jit(sent_mha_forward)
    out = jax.block_until_ready(fwd(x, slab))
    assert out.shape == (SEQ_LEN, BATCH, DOWN_DIM), out.shape

    ref = jax.block_until_ready(_reference(x, params))
    # pl.reciprocal(approx=True) in the softmax denominator and DEFAULT (bf16) MXU precision
    # add a few 1e-4 of relative error versus the exact f32 reference, hence the tolerance.
    assert jnp.allclose(out, ref, atol=5e-3, rtol=5e-3), float(jnp.max(jnp.abs(out - ref)))

    print("KERNEL_OK")
</pallas_src>

<mosaic_0001>
module attributes {stable_mosaic.version = 11 : i64} {
  func.func @sent_mha_kernel(%arg0: memref<16x32xf32, #tpu.memory_space<vmem>>, %arg1: memref<208x128xf32, #tpu.memory_space<vmem>>, %arg2: memref<16x16xf32, #tpu.memory_space<vmem>>) attributes {dimension_semantics = [], scalar_prefetch = 0 : i64, scratch_operands = 0 : i64, tpu.core_type = #tpu.core_type<tc>} {
    %c0 = arith.constant 0 : index
    %c0_0 = arith.constant 0 : index
    %0 = vector.load %arg0[%c0, %c0_0] : memref<16x32xf32, #tpu.memory_space<vmem>>, vector<16x32xf32>
    %c0_1 = arith.constant 0 : index
    %c0_2 = arith.constant 0 : index
    %1 = vector.load %arg1[%c0_1, %c0_2] : memref<208x128xf32, #tpu.memory_space<vmem>>, vector<32x96xf32>
    %c192 = arith.constant 192 : index
    %c0_3 = arith.constant 0 : index
    %2 = vector.load %arg1[%c192, %c0_3] : memref<208x128xf32, #tpu.memory_space<vmem>>, vector<1x96xf32>
    %cst = arith.constant dense<0.000000e+00> : vector<16x96xf32>
    %3 = tpu.matmul %0, %1, %cst {dimension_numbers = #tpu.dot_dimension_numbers<[1], [0], [0], [1], [0, 0, 1, 1], [], []>} : vector<16x32xf32>, vector<32x96xf32>, vector<16x96xf32> -> vector<16x96xf32>
    %4 = vector.broadcast %2 : vector<1x96xf32> to vector<16x96xf32>
    %5 = arith.addf %3, %4 : vector<16x96xf32>
    %c176 = arith.constant 176 : index
    %c0_4 = arith.constant 0 : index
    %6 = vector.load %arg1[%c176, %c0_4] : memref<208x128xf32, #tpu.memory_space<vmem>>, vector<16x16xf32>
    %7 = vector.extract_strided_slice %5 {offsets = [0, 0], sizes = [16, 8], strides = [1, 1]} : vector<16x96xf32> to vector<16x8xf32>
    %8 = vector.extract_strided_slice %5 {offsets = [0, 32], sizes = [16, 8], strides = [1, 1]} : vector<16x96xf32> to vector<16x8xf32>
    %9 = vector.extract_strided_slice %5 {offsets = [0, 64], sizes = [16, 8], strides = [1, 1]} : vector<16x96xf32> to vector<16x8xf32>
    %cst_5 = arith.constant dense<0.000000e+00> : vector<16x16xf32>
    %10 = tpu.matmul %7, %8, %cst_5 {dimension_numbers = #tpu.dot_dimension_numbers<[1], [1], [0], [0], [0, 0, 1, 0], [], []>} : vector<16x8xf32>, vector<16x8xf32>, vector<16x16xf32> -> vector<16x16xf32>
    %11 = arith.addf %10, %6 : vector<16x16xf32>
    %cst_6 = arith.constant dense<0xFF800000> : vector<16xf32>
    %12 = vector.multi_reduction <maximumf>, %11, %cst_6 [1] : vector<16x16xf32> to vector<16xf32>
    %13 = vector.shape_cast %12 : vector<16xf32> to vector<16x1xf32>
    %14 = vector.broadcast %13 : vector<16x1xf32> to vector<16x16xf32>
    %15 = arith.subf %11, %14 : vector<16x16xf32>
    %16 = math.exp %15 : vector<16x16xf32>
    %cst_7 = arith.constant dense<0.000000e+00> : vector<16xf32>
    %17 = vector.multi_reduction <add>, %16, %cst_7 [1] : vector<16x16xf32> to vector<16xf32>
    %18 = vector.shape_cast %17 : vector<16xf32> to vector<16x1xf32>
    %19 = tpu.reciprocal %18 {approx = true} : vector<16x1xf32> -> vector<16x1xf32>
    %20 = vector.broadcast %19 : vector<16x1xf32> to vector<16x16xf32>
    %21 = arith.mulf %16, %20 : vector<16x16xf32>
    %cst_8 = arith.constant dense<0.000000e+00> : vector<16x8xf32>
    %22 = tpu.matmul %21, %9, %cst_8 {dimension_numbers = #tpu.dot_dimension_numbers<[1], [0], [0], [1], [0, 0, 1, 1], [], []>} : vector<16x16xf32>, vector<16x8xf32>, vector<16x8xf32> -> vector<16x8xf32>
    %23 = vector.extract_strided_slice %5 {offsets = [0, 8], sizes = [16, 8], strides = [1, 1]} : vector<16x96xf32> to vector<16x8xf32>
    %24 = vector.extract_strided_slice %5 {offsets = [0, 40], sizes = [16, 8], strides = [1, 1]} : vector<16x96xf32> to vector<16x8xf32>
    %25 = vector.extract_strided_slice %5 {offsets = [0, 72], sizes = [16, 8], strides = [1, 1]} : vector<16x96xf32> to vector<16x8xf32>
    %cst_9 = arith.constant dense<0.000000e+00> : vector<16x16xf32>
    %26 = tpu.matmul %23, %24, %cst_9 {dimension_numbers = #tpu.dot_dimension_numbers<[1], [1], [0], [0], [0, 0, 1, 0], [], []>} : vector<16x8xf32>, vector<16x8xf32>, vector<16x16xf32> -> vector<16x16xf32>
    %27 = arith.addf %26, %6 : vector<16x16xf32>
    %cst_10 = arith.constant dense<0xFF800000> : vector<16xf32>
    %28 = vector.multi_reduction <maximumf>, %27, %cst_10 [1] : vector<16x16xf32> to vector<16xf32>
    %29 = vector.shape_cast %28 : vector<16xf32> to vector<16x1xf32>
    %30 = vector.broadcast %29 : vector<16x1xf32> to vector<16x16xf32>
    %31 = arith.subf %27, %30 : vector<16x16xf32>
    %32 = math.exp %31 : vector<16x16xf32>
    %cst_11 = arith.constant dense<0.000000e+00> : vector<16xf32>
    %33 = vector.multi_reduction <add>, %32, %cst_11 [1] : vector<16x16xf32> to vector<16xf32>
    %34 = vector.shape_cast %33 : vector<16xf32> to vector<16x1xf32>
    %35 = tpu.reciprocal %34 {approx = true} : vector<16x1xf32> -> vector<16x1xf32>
    %36 = vector.broadcast %35 : vector<16x1xf32> to vector<16x16xf32>
    %37 = arith.mulf %32, %36 : vector<16x16xf32>
    %cst_12 = arith.constant dense<0.000000e+00> : vector<16x8xf32>
    %38 = tpu.matmul %37, %25, %cst_12 {dimension_numbers = #tpu.dot_dimension_numbers<[1], [0], [0], [1], [0, 0, 1, 1], [], []>} : vector<16x16xf32>, vector<16x8xf32>, vector<16x8xf32> -> vector<16x8xf32>
    %39 = vector.extract_strided_slice %5 {offsets = [0, 16], sizes = [16, 8], strides = [1, 1]} : vector<16x96xf32> to vector<16x8xf32>
    %40 = vector.extract_strided_slice %5 {offsets = [0, 48], sizes = [16, 8], strides = [1, 1]} : vector<16x96xf32> to vector<16x8xf32>
    %41 = vector.extract_strided_slice %5 {offsets = [0, 80], sizes = [16, 8], strides = [1, 1]} : vector<16x96xf32> to vector<16x8xf32>
    %cst_13 = arith.constant dense<0.000000e+00> : vector<16x16xf32>
    %42 = tpu.matmul %39, %40, %cst_13 {dimension_numbers = #tpu.dot_dimension_numbers<[1], [1], [0], [0], [0, 0, 1, 0], [], []>} : vector<16x8xf32>, vector<16x8xf32>, vector<16x16xf32> -> vector<16x16xf32>
    %43 = arith.addf %42, %6 : vector<16x16xf32>
    %cst_14 = arith.constant dense<0xFF800000> : vector<16xf32>
    %44 = vector.multi_reduction <maximumf>, %43, %cst_14 [1] : vector<16x16xf32> to vector<16xf32>
    %45 = vector.shape_cast %44 : vector<16xf32> to vector<16x1xf32>
    %46 = vector.broadcast %45 : vector<16x1xf32> to vector<16x16xf32>
    %47 = arith.subf %43, %46 : vector<16x16xf32>
    %48 = math.exp %47 : vector<16x16xf32>
    %cst_15 = arith.constant dense<0.000000e+00> : vector<16xf32>
    %49 = vector.multi_reduction <add>, %48, %cst_15 [1] : vector<16x16xf32> to vector<16xf32>
    %50 = vector.shape_cast %49 : vector<16xf32> to vector<16x1xf32>
    %51 = tpu.reciprocal %50 {approx = true} : vector<16x1xf32> -> vector<16x1xf32>
    %52 = vector.broadcast %51 : vector<16x1xf32> to vector<16x16xf32>
    %53 = arith.mulf %48, %52 : vector<16x16xf32>
    %cst_16 = arith.constant dense<0.000000e+00> : vector<16x8xf32>
    %54 = tpu.matmul %53, %41, %cst_16 {dimension_numbers = #tpu.dot_dimension_numbers<[1], [0], [0], [1], [0, 0, 1, 1], [], []>} : vector<16x16xf32>, vector<16x8xf32>, vector<16x8xf32> -> vector<16x8xf32>
    %55 = vector.extract_strided_slice %5 {offsets = [0, 24], sizes = [16, 8], strides = [1, 1]} : vector<16x96xf32> to vector<16x8xf32>
    %56 = vector.extract_strided_slice %5 {offsets = [0, 56], sizes = [16, 8], strides = [1, 1]} : vector<16x96xf32> to vector<16x8xf32>
    %57 = vector.extract_strided_slice %5 {offsets = [0, 88], sizes = [16, 8], strides = [1, 1]} : vector<16x96xf32> to vector<16x8xf32>
    %cst_17 = arith.constant dense<0.000000e+00> : vector<16x16xf32>
    %58 = tpu.matmul %55, %56, %cst_17 {dimension_numbers = #tpu.dot_dimension_numbers<[1], [1], [0], [0], [0, 0, 1, 0], [], []>} : vector<16x8xf32>, vector<16x8xf32>, vector<16x16xf32> -> vector<16x16xf32>
    %59 = arith.addf %58, %6 : vector<16x16xf32>
    %cst_18 = arith.constant dense<0xFF800000> : vector<16xf32>
    %60 = vector.multi_reduction <maximumf>, %59, %cst_18 [1] : vector<16x16xf32> to vector<16xf32>
    %61 = vector.shape_cast %60 : vector<16xf32> to vector<16x1xf32>
    %62 = vector.broadcast %61 : vector<16x1xf32> to vector<16x16xf32>
    %63 = arith.subf %59, %62 : vector<16x16xf32>
    %64 = math.exp %63 : vector<16x16xf32>
    %cst_19 = arith.constant dense<0.000000e+00> : vector<16xf32>
    %65 = vector.multi_reduction <add>, %64, %cst_19 [1] : vector<16x16xf32> to vector<16xf32>
    %66 = vector.shape_cast %65 : vector<16xf32> to vector<16x1xf32>
    %67 = tpu.reciprocal %66 {approx = true} : vector<16x1xf32> -> vector<16x1xf32>
    %68 = vector.broadcast %67 : vector<16x1xf32> to vector<16x16xf32>
    %69 = arith.mulf %64, %68 : vector<16x16xf32>
    %cst_20 = arith.constant dense<0.000000e+00> : vector<16x8xf32>
    %70 = tpu.matmul %69, %57, %cst_20 {dimension_numbers = #tpu.dot_dimension_numbers<[1], [0], [0], [1], [0, 0, 1, 1], [], []>} : vector<16x16xf32>, vector<16x8xf32>, vector<16x8xf32> -> vector<16x8xf32>
    %71 = tpu.concatenate %22, %38, %54, %70 in 1 : vector<16x8xf32>, vector<16x8xf32>, vector<16x8xf32>, vector<16x8xf32> -> vector<16x32xf32>
    %c32 = arith.constant 32 : index
    %c0_21 = arith.constant 0 : index
    %72 = vector.load %arg1[%c32, %c0_21] : memref<208x128xf32, #tpu.memory_space<vmem>>, vector<32x32xf32>
    %cst_22 = arith.constant dense<0.000000e+00> : vector<16x32xf32>
    %73 = tpu.matmul %71, %72, %cst_22 {dimension_numbers = #tpu.dot_dimension_numbers<[1], [0], [0], [1], [0, 0, 1, 1], [], []>} : vector<16x32xf32>, vector<32x32xf32>, vector<16x32xf32> -> vector<16x32xf32>
    %c193 = arith.constant 193 : index
    %c0_23 = arith.constant 0 : index
    %74 = vector.load %arg1[%c193, %c0_23] : memref<208x128xf32, #tpu.memory_space<vmem>>, vector<1x32xf32>
    %75 = vector.broadcast %74 : vector<1x32xf32> to vector<16x32xf32>
    %76 = arith.addf %73, %75 : vector<16x32xf32>
    %77 = arith.addf %76, %0 : vector<16x32xf32>
    %c197 = arith.constant 197 : index
    %c0_24 = arith.constant 0 : index
    %78 = vector.load %arg1[%c197, %c0_24] : memref<208x128xf32, #tpu.memory_space<vmem>>, vector<1x32xf32>
    %c198 = arith.constant 198 : index
    %c0_25 = arith.constant 0 : index
    %79 = vector.load %arg1[%c198, %c0_25] : memref<208x128xf32, #tpu.memory_space<vmem>>, vector<1x32xf32>
    %cst_26 = arith.constant dense<0.000000e+00> : vector<16xf32>
    %80 = vector.multi_reduction <add>, %77, %cst_26 [1] : vector<16x32xf32> to vector<16xf32>
    %81 = vector.shape_cast %80 : vector<16xf32> to vector<16x1xf32>
    %cst_27 = arith.constant 3.200000e+01 : f32
    %82 = vector.broadcast %cst_27 : f32 to vector<16x1xf32>
    %83 = arith.divf %81, %82 : vector<16x1xf32>
    %84 = arith.mulf %77, %77 : vector<16x32xf32>
    %cst_28 = arith.constant dense<0.000000e+00> : vector<16xf32>
    %85 = vector.multi_reduction <add>, %84, %cst_28 [1] : vector<16x32xf32> to vector<16xf32>
    %86 = vector.shape_cast %85 : vector<16xf32> to vector<16x1xf32>
    %cst_29 = arith.constant 3.200000e+01 : f32
    %87 = vector.broadcast %cst_29 : f32 to vector<16x1xf32>
    %88 = arith.divf %86, %87 : vector<16x1xf32>
    %89 = arith.mulf %83, %83 : vector<16x1xf32>
    %90 = arith.subf %88, %89 : vector<16x1xf32>
    %91 = vector.broadcast %83 : vector<16x1xf32> to vector<16x32xf32>
    %92 = arith.subf %77, %91 : vector<16x32xf32>
    %cst_30 = arith.constant 9.99999974E-6 : f32
    %93 = vector.broadcast %cst_30 : f32 to vector<16x1xf32>
    %94 = arith.addf %90, %93 : vector<16x1xf32>
    %95 = math.rsqrt %94 : vector<16x1xf32>
    %96 = vector.broadcast %95 : vector<16x1xf32> to vector<16x32xf32>
    %97 = arith.mulf %92, %96 : vector<16x32xf32>
    %98 = vector.broadcast %78 : vector<1x32xf32> to vector<16x32xf32>
    %99 = arith.mulf %97, %98 : vector<16x32xf32>
    %100 = vector.broadcast %79 : vector<1x32xf32> to vector<16x32xf32>
    %101 = arith.addf %99, %100 : vector<16x32xf32>
    %c64 = arith.constant 64 : index
    %c0_31 = arith.constant 0 : index
    %102 = vector.load %arg1[%c64, %c0_31] : memref<208x128xf32, #tpu.memory_space<vmem>>, vector<32x64xf32>
    %cst_32 = arith.constant dense<0.000000e+00> : vector<16x64xf32>
    %103 = tpu.matmul %101, %102, %cst_32 {dimension_numbers = #tpu.dot_dimension_numbers<[1], [0], [0], [1], [0, 0, 1, 1], [], []>} : vector<16x32xf32>, vector<32x64xf32>, vector<16x64xf32> -> vector<16x64xf32>
    %c194 = arith.constant 194 : index
    %c0_33 = arith.constant 0 : index
    %104 = vector.load %arg1[%c194, %c0_33] : memref<208x128xf32, #tpu.memory_space<vmem>>, vector<1x64xf32>
    %105 = vector.broadcast %104 : vector<1x64xf32> to vector<16x64xf32>
    %106 = arith.addf %103, %105 : vector<16x64xf32>
    %cst_34 = arith.constant 0.000000e+00 : f32
    %107 = vector.broadcast %cst_34 : f32 to vector<16x64xf32>
    %108 = arith.maximumf %106, %107 : vector<16x64xf32>
    %c96 = arith.constant 96 : index
    %c0_35 = arith.constant 0 : index
    %109 = vector.load %arg1[%c96, %c0_35] : memref<208x128xf32, #tpu.memory_space<vmem>>, vector<64x16xf32>
    %cst_36 = arith.constant dense<0.000000e+00> : vector<16x16xf32>
    %110 = tpu.matmul %108, %109, %cst_36 {dimension_numbers = #tpu.dot_dimension_numbers<[1], [0], [0], [1], [0, 0, 1, 1], [], []>} : vector<16x64xf32>, vector<64x16xf32>, vector<16x16xf32> -> vector<16x16xf32>
    %c195 = arith.constant 195 : index
    %c0_37 = arith.constant 0 : index
    %111 = vector.load %arg1[%c195, %c0_37] : memref<208x128xf32, #tpu.memory_space<vmem>>, vector<1x16xf32>
    %112 = vector.broadcast %111 : vector<1x16xf32> to vector<16x16xf32>
    %113 = arith.addf %110, %112 : vector<16x16xf32>
    %cst_38 = arith.constant 0.000000e+00 : f32
    %114 = vector.broadcast %cst_38 : f32 to vector<16x16xf32>
    %115 = arith.maximumf %113, %114 : vector<16x16xf32>
    %c160 = arith.constant 160 : index
    %c0_39 = arith.constant 0 : index
    %116 = vector.load %arg1[%c160, %c0_39] : memref<208x128xf32, #tpu.memory_space<vmem>>, vector<16x16xf32>
    %cst_40 = arith.constant dense<0.000000e+00> : vector<16x16xf32>
    %117 = tpu.matmul %115, %116, %cst_40 {dimension_numbers = #tpu.dot_dimension_numbers<[1], [0], [0], [1], [0, 0, 1, 1], [], []>} : vector<16x16xf32>, vector<16x16xf32>, vector<16x16xf32> -> vector<16x16xf32>
    %c196 = arith.constant 196 : index
    %c0_41 = arith.constant 0 : index
    %118 = vector.load %arg1[%c196, %c0_41] : memref<208x128xf32, #tpu.memory_space<vmem>>, vector<1x16xf32>
    %119 = vector.broadcast %118 : vector<1x16xf32> to vector<16x16xf32>
    %120 = arith.addf %117, %119 : vector<16x16xf32>
    %121 = vector.extract_strided_slice %76 {offsets = [0, 0], sizes = [16, 16], strides = [1, 1]} : vector<16x32xf32> to vector<16x16xf32>
    %122 = arith.addf %120, %121 : vector<16x16xf32>
    %c199 = arith.constant 199 : index
    %c0_42 = arith.constant 0 : index
    %123 = vector.load %arg1[%c199, %c0_42] : memref<208x128xf32, #tpu.memory_space<vmem>>, vector<1x16xf32>
    %c200 = arith.constant 200 : index
    %c0_43 = arith.constant 0 : index
    %124 = vector.load %arg1[%c200, %c0_43] : memref<208x128xf32, #tpu.memory_space<vmem>>, vector<1x16xf32>
    %cst_44 = arith.constant dense<0.000000e+00> : vector<16xf32>
    %125 = vector.multi_reduction <add>, %122, %cst_44 [1] : vector<16x16xf32> to vector<16xf32>
    %126 = vector.shape_cast %125 : vector<16xf32> to vector<16x1xf32>
    %cst_45 = arith.constant 1.600000e+01 : f32
    %127 = vector.broadcast %cst_45 : f32 to vector<16x1xf32>
    %128 = arith.divf %126, %127 : vector<16x1xf32>
    %129 = arith.mulf %122, %122 : vector<16x16xf32>
    %cst_46 = arith.constant dense<0.000000e+00> : vector<16xf32>
    %130 = vector.multi_reduction <add>, %129, %cst_46 [1] : vector<16x16xf32> to vector<16xf32>
    %131 = vector.shape_cast %130 : vector<16xf32> to vector<16x1xf32>
    %cst_47 = arith.constant 1.600000e+01 : f32
    %132 = vector.broadcast %cst_47 : f32 to vector<16x1xf32>
    %133 = arith.divf %131, %132 : vector<16x1xf32>
    %134 = arith.mulf %128, %128 : vector<16x1xf32>
    %135 = arith.subf %133, %134 : vector<16x1xf32>
    %136 = vector.broadcast %128 : vector<16x1xf32> to vector<16x16xf32>
    %137 = arith.subf %122, %136 : vector<16x16xf32>
    %cst_48 = arith.constant 9.99999974E-6 : f32
    %138 = vector.broadcast %cst_48 : f32 to vector<16x1xf32>
    %139 = arith.addf %135, %138 : vector<16x1xf32>
    %140 = math.rsqrt %139 : vector<16x1xf32>
    %141 = vector.broadcast %140 : vector<16x1xf32> to vector<16x16xf32>
    %142 = arith.mulf %137, %141 : vector<16x16xf32>
    %143 = vector.broadcast %123 : vector<1x16xf32> to vector<16x16xf32>
    %144 = arith.mulf %142, %143 : vector<16x16xf32>
    %145 = vector.broadcast %124 : vector<1x16xf32> to vector<16x16xf32>
    %146 = arith.addf %144, %145 : vector<16x16xf32>
    %c0_49 = arith.constant 0 : index
    %c0_50 = arith.constant 0 : index
    %147 = vector.load %arg2[%c0_49, %c0_50] : memref<16x16xf32, #tpu.memory_space<vmem>>, vector<16x16xf32>
    tpu.vector_store %arg2[%c0_49, %c0_50], %146 {strides = array<i32>} : memref<16x16xf32, #tpu.memory_space<vmem>>, vector<16x16xf32>,
    return
  }
}

</mosaic_0001>

<llo_original>
// kernel: sent_mha_forward.1
$region0: #{sent_mha_forward.1}
  #allocation0 [shape = 'u32[]', space=smem, size = 0x4, offset = 0x4, fixed_abs, tag = 'smem constant byte address 0x4 - core index']
  #allocation1 [shape = 'u32[144,128]{1,0:T(1,128)}', space=vmem, size = 0x12000, scoped, tag = 'internal scratch']
  %s0 = inlined_call_operand.hbm [shape: f32[16,32], index: 0, kind: input, shape index: {}]
  %s1 = inlined_call_operand.hbm [shape: f32[208,128], index: 1, kind: input, shape index: {}]
  %s2 = inlined_call_operand.hbm [shape: f32[16,16], index: 2, kind: output, shape index: {}]
  %s3 = sld [smem:[#allocation0]]
  $region26: #{sent_mha_forward.1} parent=0
    _
  %s5 = ssub.s32 1, %s3
  %s6 = scalar_select 0, %s5, %s3
  $region1: #{sent_mha_forward.1} parent=0
    #allocation2 [shape = 'u8[8192]{0}', space=vmem, size = 0x2000, scoped, tag = 'input window, operand 0, single buffered']
    #allocation3 [shape = 's32[1]{0}', space=sflag, size = 0x4, scoped, tag = 'scoped memory for sent_mha_forward.1']
    #allocation4 [shape = 's32[1]{0}', space=sflag, size = 0x4, scoped, tag = 'scoped memory for sent_mha_forward.1']
    #allocation5 [shape = 'u8[106496]{0}', space=vmem, size = 0x1a000, scoped, tag = 'input window, operand 1, single buffered']
    #allocation6 [shape = 's32[1]{0}', space=sflag, size = 0x4, scoped, tag = 'scoped memory for sent_mha_forward.1']
    #allocation7 [shape = 'u8[8192]{0}', space=vmem, size = 0x2000, scoped, tag = 'output window, operand 0, single buffered']
    %7 = vsyncpa [#allocation3], 0
    %8 = vsyncpa [#allocation6], 0
    %9 = vsyncpa [#allocation4], 0
    // Predicated region
    $region2: #{sent_mha_forward.1} parent=1 // pred_check
      _
    $region3: #{sent_mha_forward.1} parent=1 // pred_check_branch
      %11 = sbr.rel (0) target = $region5
    $region4: #{sent_mha_forward.1} parent=1 // pred_region
      %s13 = ssub.s32 256, 256
      %14 = vsyncadd [#allocation3], %s13
      %s15 = sshll.u32 [#allocation2], 4
      %s16 = int_to_ptr.vmem [resolvable:$true] %s15
      %21 = dma.hbm_to_vmem [thread:$0]  %s0, 256, %s16, [#allocation3], 128, 128, 8
    $region5: #{sent_mha_forward.1} parent=1 // pred_fallthru
      _
    // Predicated region
    $region6: #{sent_mha_forward.1} parent=1 // pred_check
      _
    $region7: #{sent_mha_forward.1} parent=1 // pred_check_branch
      %23 = sbr.rel (0) target = $region9
    $region8: #{sent_mha_forward.1} parent=1 // pred_region
      %s25 = ssub.s32 3328, 3328
      %26 = vsyncadd [#allocation6], %s25
      %s27 = sshll.u32 [#allocation5], 4
      %s28 = int_to_ptr.vmem [resolvable:$true] %s27
      %33 = dma.hbm_to_vmem [thread:$0]  %s1, 3328, %s28, [#allocation6], 128, 128, 8
    $region9: #{sent_mha_forward.1} parent=1 // pred_fallthru
      _
    // Predicated region
    $region10: #{sent_mha_forward.1} parent=1 // pred_check
      _
    $region11: #{sent_mha_forward.1} parent=1 // pred_check_branch
      %35 = sbr.rel (0) target = $region13
    $region12: #{sent_mha_forward.1} parent=1 // pred_region
      %36 = dma.done [#allocation3], 256
    $region13: #{sent_mha_forward.1} parent=1 // pred_fallthru
      _
    // Predicated region
    $region14: #{sent_mha_forward.1} parent=1 // pred_check
      _
    $region15: #{sent_mha_forward.1} parent=1 // pred_check_branch
      %38 = sbr.rel (0) target = $region17
    $region16: #{sent_mha_forward.1} parent=1 // pred_region
      %39 = dma.done [#allocation6], 3328
    $region17: #{sent_mha_forward.1} parent=1 // pred_fallthru
      _
    %v40 = vld [vmem:[#allocation2] sm:$0xff]
    %v41 = vld [vmem:[#allocation2 + $0x8] sm:$0xff]
    %v42 = vld [vmem:[#allocation5] sm:$0xff]
    %v43 = vld [vmem:[#allocation5 + $0x8] sm:$0xff]
    %v44 = vld [vmem:[#allocation5 + $0x10] sm:$0xff]
    %v45 = vld [vmem:[#allocation5 + $0x18] sm:$0xff]
    %v46 = vld [vmem:[#allocation5 + $0xc0] sm:$0x1]
    %v47 = vlaneseq
    %v48 = vshrl.u32 %v47, 7
    %v49 = vsub.s32 0, %v48
    %v50 = vrot.slane %v46, %v49
    %vm51 = vcmask 261120
    %v53 = vsel %vm51, %v40, 0
    %v56 = vsel %vm51, %v41, 0
    %58 = vmatprep.subr.mxu0 0.0
    %59 = vmatpush1.msra.mxu0 %v42
    %60 = vmatprep.subr.mxu0 0.0
    %61 = vmatpush1.msra.mxu0 %v43
    %62 = vmatprep.subr.mxu0 0.0
    %63 = vmatpush1.msra.mxu0 %v44
    %64 = vmatprep.subr.mxu0 0.0
    %65 = vmatpush1.msra.mxu0 %v45
    %66 = vmatprep.subr.mxu0 0.0
    %67 = vmatpush1.msra.mxu0 0.0
    %68 = vmatprep.subr.mxu0 0.0
    %69 = vmatpush1.msra.mxu0 0.0
    %70 = vmatprep.subr.mxu0 0.0
    %71 = vmatpush1.msra.mxu0 0.0
    %72 = vmatprep.subr.mxu0 0.0
    %73 = vmatpush1.msra.mxu0 0.0
    %74 = vmatprep.subr.mxu0 0.0
    %75 = vmatpush1.msra.mxu0 0.0
    %76 = vmatprep.subr.mxu0 0.0
    %77 = vmatpush1.msra.mxu0 0.0
    %78 = vmatprep.subr.mxu0 0.0
    %79 = vmatpush1.msra.mxu0 0.0
    %80 = vmatprep.subr.mxu0 0.0
    %81 = vmatpush1.msra.mxu0 0.0
    %82 = vmatprep.subr.mxu0 0.0
    %83 = vmatpush1.msra.mxu0 0.0
    %84 = vmatprep.subr.mxu0 0.0
    %85 = vmatpush1.msra.mxu0 0.0
    %86 = vmatprep.subr.mxu0 0.0
    %87 = vmatpush1.msra.mxu0 0.0
    %88 = vmatprep.subr.mxu0 0.0
    %89 = vmatpush1.msra.mxu0 0.0
    %90 = vmatprep.subr.mxu0 0.0
    %91 = vmatpush1.msra.mxu0 0.0
    %92 = vmatprep.subr.mxu0 0.0
    %93 = vmatpush1.msra.mxu0 0.0
    %94 = vmatprep.subr.mxu0 0.0
    %95 = vmatpush1.msra.mxu0 0.0
    %96 = vmatprep.subr.mxu0 0.0
    %97 = vmatpush1.msra.mxu0 0.0
    %98 = vmatprep.subr.mxu0 0.0
    %99 = vmatpush1.msra.mxu0 0.0
    %100 = vmatprep.subr.mxu0 0.0
    %101 = vmatpush1.msra.mxu0 0.0
    %102 = vmatprep.subr.mxu0 0.0
    %103 = vmatpush1.msra.mxu0 0.0
    %104 = vmatprep.subr.mxu0 0.0
    %105 = vmatpush1.msra.mxu0 0.0
    %106 = vmatprep.subr.mxu0 0.0
    %107 = vmatpush1.msra.mxu0 0.0
    %108 = vmatprep.subr.mxu0 0.0
    %109 = vmatpush1.msra.mxu0 0.0
    %110 = vmatprep.subr.mxu0 0.0
    %111 = vmatpush1.msra.mxu0 0.0
    %112 = vmatprep.subr.mxu0 0.0
    %113 = vmatpush1.msra.mxu0 0.0
    %114 = vmatprep.subr.mxu0 0.0
    %115 = vmatpush1.msra.mxu0 0.0
    %116 = vmatprep.subr.mxu0 0.0
    %117 = vmatpush1.msra.mxu0 0.0
    %118 = vmatprep.subr.mxu0 0.0
    %119 = vmatpush1.msra.mxu0 0.0
    %120 = vmatprep.subr.mxu0 0.0
    %121 = vmatpush1.msra.mxu0 0.0
    %122 = vmatprep.mubr.f32.mxu0 0.0
    %123 = vmatmul.mubr.f32.gmra.mrb[0].mxu0 %v53
    %v124 = vpop.f32.mrb[0].mxu0
    %v125 = vadd.f32 %v50, %v124
    %v126 = vpop.f32.mrb[0].mxu0
    %127 = vmatprep.mubr.f32.mxu0 0.0
    %128 = vmatmul.mubr.f32.gmra.mrb[0].mxu0 %v56
    %v129 = vpop.f32.mrb[0].mxu0
    %v130 = vadd.f32 %v50, %v129
    %v131 = vpop.f32.mrb[0].mxu0
    %132 = vdwg.mxu0
    %v133 = vld [vmem:[#allocation5 + $0xb0] sm:$0xff]
    %v134 = vld [vmem:[#allocation5 + $0xb8] sm:$0xff]
    %137 = vrot.lane.b32.xlu0 %v125, 96
    %v138 = vpop.permute.xlu0 %137
    %139 = vrot.lane.b32.xlu0 %v130, 96
    %v140 = vpop.permute.xlu0 %139
    %vm141 = vcmask 64512
    %v142 = vsel %vm141, %v125, 0
    %v144 = vsel %vm141, %v130, 0
    %v146 = vsel %vm141, %v138, 0
    %v148 = vsel %vm141, %v140, 0
    %150 = vmatprep.subr.mxu0 0.0
    %151 = vmatpush1.xpose.msra.mxu0 %v146
    %152 = vmatprep.subr.mxu0 0.0
    %153 = vmatpush1.xpose.msra.mxu0 %v148
    %154 = vmatprep.subr.mxu0 0.0
    %155 = vmatpush1.xpose.msra.mxu0 0.0
    %156 = vmatprep.subr.mxu0 0.0
    %157 = vmatpush1.xpose.msra.mxu0 0.0
    %158 = vmatprep.subr.mxu0 0.0
    %159 = vmatpush1.xpose.msra.mxu0 0.0
    %160 = vmatprep.subr.mxu0 0.0
    %161 = vmatpush1.xpose.msra.mxu0 0.0
    %162 = vmatprep.subr.mxu0 0.0
    %163 = vmatpush1.xpose.msra.mxu0 0.0
    %164 = vmatprep.subr.mxu0 0.0
    %165 = vmatpush1.xpose.msra.mxu0 0.0
    %166 = vmatprep.subr.mxu0 0.0
    %167 = vmatpush1.xpose.msra.mxu0 0.0
    %168 = vmatprep.subr.mxu0 0.0
    %169 = vmatpush1.xpose.msra.mxu0 0.0
    %170 = vmatprep.subr.mxu0 0.0
    %171 = vmatpush1.xpose.msra.mxu0 0.0
    %172 = vmatprep.subr.mxu0 0.0
    %173 = vmatpush1.xpose.msra.mxu0 0.0
    %174 = vmatprep.subr.mxu0 0.0
    %175 = vmatpush1.xpose.msra.mxu0 0.0
    %176 = vmatprep.subr.mxu0 0.0
    %177 = vmatpush1.xpose.msra.mxu0 0.0
    %178 = vmatprep.subr.mxu0 0.0
    %179 = vmatpush1.xpose.msra.mxu0 0.0
    %180 = vmatprep.subr.mxu0 0.0
    %181 = vmatpush1.xpose.msra.mxu0 0.0
    %182 = vmatprep.subr.mxu0 0.0
    %183 = vmatpush1.xpose.msra.mxu0 0.0
    %184 = vmatprep.subr.mxu0 0.0
    %185 = vmatpush1.xpose.msra.mxu0 0.0
    %186 = vmatprep.subr.mxu0 0.0
    %187 = vmatpush1.xpose.msra.mxu0 0.0
    %188 = vmatprep.subr.mxu0 0.0
    %189 = vmatpush1.xpose.msra.mxu0 0.0
    %190 = vmatprep.subr.mxu0 0.0
    %191 = vmatpush1.xpose.msra.mxu0 0.0
    %192 = vmatprep.subr.mxu0 0.0
    %193 = vmatpush1.xpose.msra.mxu0 0.0
    %194 = vmatprep.subr.mxu0 0.0
    %195 = vmatpush1.xpose.msra.mxu0 0.0
    %196 = vmatprep.subr.mxu0 0.0
    %197 = vmatpush1.xpose.msra.mxu0 0.0
    %198 = vmatprep.subr.mxu0 0.0
    %199 = vmatpush1.xpose.msra.mxu0 0.0
    %200 = vmatprep.subr.mxu0 0.0
    %201 = vmatpush1.xpose.msra.mxu0 0.0
    %202 = vmatprep.subr.mxu0 0.0
    %203 = vmatpush1.xpose.msra.mxu0 0.0
    %204 = vmatprep.subr.mxu0 0.0
    %205 = vmatpush1.xpose.msra.mxu0 0.0
    %206 = vmatprep.subr.mxu0 0.0
    %207 = vmatpush1.xpose.msra.mxu0 0.0
    %208 = vmatprep.subr.mxu0 0.0
    %209 = vmatpush1.xpose.msra.mxu0 0.0
    %210 = vmatprep.subr.mxu0 0.0
    %211 = vmatpush1.xpose.msra.mxu0 0.0
    %212 = vmatprep.subr.mxu0 0.0
    %213 = vmatpush1.xpose.msra.mxu0 0.0
    %214 = vmatprep.mubr.f32.mxu0 0.0
    %215 = vmatmul.mubr.f32.gmra.mrb[0].mxu0 %v142
    %v216 = vpop.f32.mrb[0].mxu0
    %v217 = vadd.f32 %v133, %v216
    %v218 = vpop.f32.mrb[0].mxu0
    %219 = vmatprep.mubr.f32.mxu0 0.0
    %220 = vmatmul.mubr.f32.gmra.mrb[0].mxu0 %v144
    %v221 = vpop.f32.mrb[0].mxu0
    %v222 = vadd.f32 %v134, %v221
    %v223 = vpop.f32.mrb[0].mxu0
    %224 = vdwg.mxu0
    %vm225 = vcmask 130048
    %v226 = vsel %vm225, %v217, -inf
    %227 = vmax.xlane.f32.xlu0 %v226
    %v228 = vpop.xlane.xlu0 %227
    %v229 = vsel %vm225, %v222, -inf
    %230 = vmax.xlane.f32.xlu0 %v229
    %v231 = vpop.xlane.xlu0 %230
    %v232 = vsub.f32 %v217, %v228
    %v233 = vsub.f32 %v222, %v231
    %v234 = vmul.f32 %v232, 1.442695
    %v235 = vpow.pop %v234
    %v236 = vmul.f32 %v233, 1.442695
    %v237 = vpow.pop %v236
    %v238 = vsel %vm225, %v235, 0.0
    %239 = vadd.xlane.f32.xlu0 %v238
    %v240 = vpop.xlane.xlu0 %239
    %v241 = vsel %vm225, %v237, 0.0
    %242 = vadd.xlane.f32.xlu0 %v241
    %v243 = vpop.xlane.xlu0 %242
    %v244 = vrcp.pop %v240
    %v245 = vrcp.pop %v243
    %v246 = vmul.f32 %v235, %v244
    %v247 = vmul.f32 %v237, %v245
    %248 = vrot.lane.b32.xlu0 %v125, 64
    %v249 = vpop.permute.xlu0 %248
    %250 = vrot.lane.b32.xlu0 %v130, 64
    %v251 = vpop.permute.xlu0 %250
    %v255 = vsel %vm225, %v246, 0
    %v258 = vsel %vm225, %v247, 0
    %260 = vmatprep.subr.mxu0 0.0
    %261 = vmatpush1.msra.mxu0 %v249
    %262 = vmatprep.subr.mxu0 0.0
    %263 = vmatpush1.msra.mxu0 %v251
    %264 = vmatprep.subr.mxu0 0.0
    %265 = vmatpush1.msra.mxu0 0.0
    %266 = vmatprep.subr.mxu0 0.0
    %267 = vmatpush1.msra.mxu0 0.0
    %268 = vmatprep.subr.mxu0 0.0
    %269 = vmatpush1.msra.mxu0 0.0
    %270 = vmatprep.subr.mxu0 0.0
    %271 = vmatpush1.msra.mxu0 0.0
    %272 = vmatprep.subr.mxu0 0.0
    %273 = vmatpush1.msra.mxu0 0.0
    %274 = vmatprep.subr.mxu0 0.0
    %275 = vmatpush1.msra.mxu0 0.0
    %276 = vmatprep.subr.mxu0 0.0
    %277 = vmatpush1.msra.mxu0 0.0
    %278 = vmatprep.subr.mxu0 0.0
    %279 = vmatpush1.msra.mxu0 0.0
    %280 = vmatprep.subr.mxu0 0.0
    %281 = vmatpush1.msra.mxu0 0.0
    %282 = vmatprep.subr.mxu0 0.0
    %283 = vmatpush1.msra.mxu0 0.0
    %284 = vmatprep.subr.mxu0 0.0
    %285 = vmatpush1.msra.mxu0 0.0
    %286 = vmatprep.subr.mxu0 0.0
    %287 = vmatpush1.msra.mxu0 0.0
    %288 = vmatprep.subr.mxu0 0.0
    %289 = vmatpush1.msra.mxu0 0.0
    %290 = vmatprep.subr.mxu0 0.0
    %291 = vmatpush1.msra.mxu0 0.0
    %292 = vmatprep.subr.mxu0 0.0
    %293 = vmatpush1.msra.mxu0 0.0
    %294 = vmatprep.subr.mxu0 0.0
    %295 = vmatpush1.msra.mxu0 0.0
    %296 = vmatprep.subr.mxu0 0.0
    %297 = vmatpush1.msra.mxu0 0.0
    %298 = vmatprep.subr.mxu0 0.0
    %299 = vmatpush1.msra.mxu0 0.0
    %300 = vmatprep.subr.mxu0 0.0
    %301 = vmatpush1.msra.mxu0 0.0
    %302 = vmatprep.subr.mxu0 0.0
    %303 = vmatpush1.msra.mxu0 0.0
    %304 = vmatprep.subr.mxu0 0.0
    %305 = vmatpush1.msra.mxu0 0.0
    %306 = vmatprep.subr.mxu0 0.0
    %307 = vmatpush1.msra.mxu0 0.0
    %308 = vmatprep.subr.mxu0 0.0
    %309 = vmatpush1.msra.mxu0 0.0
    %310 = vmatprep.subr.mxu0 0.0
    %311 = vmatpush1.msra.mxu0 0.0
    %312 = vmatprep.subr.mxu0 0.0
    %313 = vmatpush1.msra.mxu0 0.0
    %314 = vmatprep.subr.mxu0 0.0
    %315 = vmatpush1.msra.mxu0 0.0
    %316 = vmatprep.subr.mxu0 0.0
    %317 = vmatpush1.msra.mxu0 0.0
    %318 = vmatprep.subr.mxu0 0.0
    %319 = vmatpush1.msra.mxu0 0.0
    %320 = vmatprep.subr.mxu0 0.0
    %321 = vmatpush1.msra.mxu0 0.0
    %322 = vmatprep.subr.mxu0 0.0
    %323 = vmatpush1.msra.mxu0 0.0
    %324 = vmatprep.mubr.f32.mxu0 0.0
    %325 = vmatmul.mubr.f32.gmra.mrb[0].mxu0 %v255
    %v326 = vpop.f32.mrb[0].mxu0
    %v327 = vadd.f32 0.0, %v326
    %v328 = vpop.f32.mrb[0].mxu0
    %329 = vmatprep.mubr.f32.mxu0 0.0
    %330 = vmatmul.mubr.f32.gmra.mrb[0].mxu0 %v258
    %v331 = vpop.f32.mrb[0].mxu0
    %v332 = vadd.f32 0.0, %v331
    %v333 = vpop.f32.mrb[0].mxu0
    %334 = vdwg.mxu0
    %335 = vrot.lane.b32.xlu0 %v125, 120
    %v336 = vpop.permute.xlu0 %335
    %337 = vrot.lane.b32.xlu0 %v130, 120
    %v338 = vpop.permute.xlu0 %337
    %339 = vrot.lane.b32.xlu0 %v125, 88
    %v340 = vpop.permute.xlu0 %339
    %341 = vrot.lane.b32.xlu0 %v130, 88
    %v342 = vpop.permute.xlu0 %341
    %v343 = vsel %vm141, %v336, 0
    %v345 = vsel %vm141, %v338, 0
    %v347 = vsel %vm141, %v340, 0
    %v349 = vsel %vm141, %v342, 0
    %351 = vmatprep.subr.mxu0 0.0
    %352 = vmatpush1.xpose.msra.mxu0 %v347
    %353 = vmatprep.subr.mxu0 0.0
    %354 = vmatpush1.xpose.msra.mxu0 %v349
    %355 = vmatprep.subr.mxu0 0.0
    %356 = vmatpush1.xpose.msra.mxu0 0.0
    %357 = vmatprep.subr.mxu0 0.0
    %358 = vmatpush1.xpose.msra.mxu0 0.0
    %359 = vmatprep.subr.mxu0 0.0
    %360 = vmatpush1.xpose.msra.mxu0 0.0
    %361 = vmatprep.subr.mxu0 0.0
    %362 = vmatpush1.xpose.msra.mxu0 0.0
    %363 = vmatprep.subr.mxu0 0.0
    %364 = vmatpush1.xpose.msra.mxu0 0.0
    %365 = vmatprep.subr.mxu0 0.0
    %366 = vmatpush1.xpose.msra.mxu0 0.0
    %367 = vmatprep.subr.mxu0 0.0
    %368 = vmatpush1.xpose.msra.mxu0 0.0
    %369 = vmatprep.subr.mxu0 0.0
    %370 = vmatpush1.xpose.msra.mxu0 0.0
    %371 = vmatprep.subr.mxu0 0.0
    %372 = vmatpush1.xpose.msra.mxu0 0.0
    %373 = vmatprep.subr.mxu0 0.0
    %374 = vmatpush1.xpose.msra.mxu0 0.0
    %375 = vmatprep.subr.mxu0 0.0
    %376 = vmatpush1.xpose.msra.mxu0 0.0
    %377 = vmatprep.subr.mxu0 0.0
    %378 = vmatpush1.xpose.msra.mxu0 0.0
    %379 = vmatprep.subr.mxu0 0.0
    %380 = vmatpush1.xpose.msra.mxu0 0.0
    %381 = vmatprep.subr.mxu0 0.0
    %382 = vmatpush1.xpose.msra.mxu0 0.0
    %383 = vmatprep.subr.mxu0 0.0
    %384 = vmatpush1.xpose.msra.mxu0 0.0
    %385 = vmatprep.subr.mxu0 0.0
    %386 = vmatpush1.xpose.msra.mxu0 0.0
    %387 = vmatprep.subr.mxu0 0.0
    %388 = vmatpush1.xpose.msra.mxu0 0.0
    %389 = vmatprep.subr.mxu0 0.0
    %390 = vmatpush1.xpose.msra.mxu0 0.0
    %391 = vmatprep.subr.mxu0 0.0
    %392 = vmatpush1.xpose.msra.mxu0 0.0
    %393 = vmatprep.subr.mxu0 0.0
    %394 = vmatpush1.xpose.msra.mxu0 0.0
    %395 = vmatprep.subr.mxu0 0.0
    %396 = vmatpush1.xpose.msra.mxu0 0.0
    %397 = vmatprep.subr.mxu0 0.0
    %398 = vmatpush1.xpose.msra.mxu0 0.0
    %399 = vmatprep.subr.mxu0 0.0
    %400 = vmatpush1.xpose.msra.mxu0 0.0
    %401 = vmatprep.subr.mxu0 0.0
    %402 = vmatpush1.xpose.msra.mxu0 0.0
    %403 = vmatprep.subr.mxu0 0.0
    %404 = vmatpush1.xpose.msra.mxu0 0.0
    %405 = vmatprep.subr.mxu0 0.0
    %406 = vmatpush1.xpose.msra.mxu0 0.0
    %407 = vmatprep.subr.mxu0 0.0
    %408 = vmatpush1.xpose.msra.mxu0 0.0
    %409 = vmatprep.subr.mxu0 0.0
    %410 = vmatpush1.xpose.msra.mxu0 0.0
    %411 = vmatprep.subr.mxu0 0.0
    %412 = vmatpush1.xpose.msra.mxu0 0.0
    %413 = vmatprep.subr.mxu0 0.0
    %414 = vmatpush1.xpose.msra.mxu0 0.0
    %415 = vmatprep.mubr.f32.mxu0 0.0
    %416 = vmatmul.mubr.f32.gmra.mrb[0].mxu0 %v343
    %v417 = vpop.f32.mrb[0].mxu0
    %v418 = vadd.f32 %v133, %v417
    %v419 = vpop.f32.mrb[0].mxu0
    %420 = vmatprep.mubr.f32.mxu0 0.0
    %421 = vmatmul.mubr.f32.gmra.mrb[0].mxu0 %v345
    %v422 = vpop.f32.mrb[0].mxu0
    %v423 = vadd.f32 %v134, %v422
    %v424 = vpop.f32.mrb[0].mxu0
    %425 = vdwg.mxu0
    %v426 = vsel %vm225, %v418, -inf
    %427 = vmax.xlane.f32.xlu0 %v426
    %v428 = vpop.xlane.xlu0 %427
    %v429 = vsel %vm225, %v423, -inf
    %430 = vmax.xlane.f32.xlu0 %v429
    %v431 = vpop.xlane.xlu0 %430
    %v432 = vsub.f32 %v418, %v428
    %v433 = vsub.f32 %v423, %v431
    %v434 = vmul.f32 %v432, 1.442695
    %v435 = vpow.pop %v434
    %v436 = vmul.f32 %v433, 1.442695
    %v437 = vpow.pop %v436
    %v438 = vsel %vm225, %v435, 0.0
    %439 = vadd.xlane.f32.xlu0 %v438
    %v440 = vpop.xlane.xlu0 %439
    %v441 = vsel %vm225, %v437, 0.0
    %442 = vadd.xlane.f32.xlu0 %v441
    %v443 = vpop.xlane.xlu0 %442
    %v444 = vrcp.pop %v440
    %v445 = vrcp.pop %v443
    %v446 = vmul.f32 %v435, %v444
    %v447 = vmul.f32 %v437, %v445
    %448 = vrot.lane.b32.xlu0 %v125, 56
    %v449 = vpop.permute.xlu0 %448
    %450 = vrot.lane.b32.xlu0 %v130, 56
    %v451 = vpop.permute.xlu0 %450
    %v455 = vsel %vm225, %v446, 0
    %v458 = vsel %vm225, %v447, 0
    %460 = vmatprep.subr.mxu0 0.0
    %461 = vmatpush1.msra.mxu0 %v449
    %462 = vmatprep.subr.mxu0 0.0
    %463 = vmatpush1.msra.mxu0 %v451
    %464 = vmatprep.subr.mxu0 0.0
    %465 = vmatpush1.msra.mxu0 0.0
    %466 = vmatprep.subr.mxu0 0.0
    %467 = vmatpush1.msra.mxu0 0.0
    %468 = vmatprep.subr.mxu0 0.0
    %469 = vmatpush1.msra.mxu0 0.0
    %470 = vmatprep.subr.mxu0 0.0
    %471 = vmatpush1.msra.mxu0 0.0
    %472 = vmatprep.subr.mxu0 0.0
    %473 = vmatpush1.msra.mxu0 0.0
    %474 = vmatprep.subr.mxu0 0.0
    %475 = vmatpush1.msra.mxu0 0.0
    %476 = vmatprep.subr.mxu0 0.0
    %477 = vmatpush1.msra.mxu0 0.0
    %478 = vmatprep.subr.mxu0 0.0
    %479 = vmatpush1.msra.mxu0 0.0
    %480 = vmatprep.subr.mxu0 0.0
    %481 = vmatpush1.msra.mxu0 0.0
    %482 = vmatprep.subr.mxu0 0.0
    %483 = vmatpush1.msra.mxu0 0.0
    %484 = vmatprep.subr.mxu0 0.0
    %485 = vmatpush1.msra.mxu0 0.0
    %486 = vmatprep.subr.mxu0 0.0
    %487 = vmatpush1.msra.mxu0 0.0
    %488 = vmatprep.subr.mxu0 0.0
    %489 = vmatpush1.msra.mxu0 0.0
    %490 = vmatprep.subr.mxu0 0.0
    %491 = vmatpush1.msra.mxu0 0.0
    %492 = vmatprep.subr.mxu0 0.0
    %493 = vmatpush1.msra.mxu0 0.0
    %494 = vmatprep.subr.mxu0 0.0
    %495 = vmatpush1.msra.mxu0 0.0
    %496 = vmatprep.subr.mxu0 0.0
    %497 = vmatpush1.msra.mxu0 0.0
    %498 = vmatprep.subr.mxu0 0.0
    %499 = vmatpush1.msra.mxu0 0.0
    %500 = vmatprep.subr.mxu0 0.0
    %501 = vmatpush1.msra.mxu0 0.0
    %502 = vmatprep.subr.mxu0 0.0
    %503 = vmatpush1.msra.mxu0 0.0
    %504 = vmatprep.subr.mxu0 0.0
    %505 = vmatpush1.msra.mxu0 0.0
    %506 = vmatprep.subr.mxu0 0.0
    %507 = vmatpush1.msra.mxu0 0.0
    %508 = vmatprep.subr.mxu0 0.0
    %509 = vmatpush1.msra.mxu0 0.0
    %510 = vmatprep.subr.mxu0 0.0
    %511 = vmatpush1.msra.mxu0 0.0
    %512 = vmatprep.subr.mxu0 0.0
    %513 = vmatpush1.msra.mxu0 0.0
    %514 = vmatprep.subr.mxu0 0.0
    %515 = vmatpush1.msra.mxu0 0.0
    %516 = vmatprep.subr.mxu0 0.0
    %517 = vmatpush1.msra.mxu0 0.0
    %518 = vmatprep.subr.mxu0 0.0
    %519 = vmatpush1.msra.mxu0 0.0
    %520 = vmatprep.subr.mxu0 0.0
    %521 = vmatpush1.msra.mxu0 0.0
    %522 = vmatprep.subr.mxu0 0.0
    %523 = vmatpush1.msra.mxu0 0.0
    %524 = vmatprep.mubr.f32.mxu0 0.0
    %525 = vmatmul.mubr.f32.gmra.mrb[0].mxu0 %v455
    %v526 = vpop.f32.mrb[0].mxu0
    %v527 = vadd.f32 0.0, %v526
    %v528 = vpop.f32.mrb[0].mxu0
    %529 = vmatprep.mubr.f32.mxu0 0.0
    %530 = vmatmul.mubr.f32.gmra.mrb[0].mxu0 %v458
    %v531 = vpop.f32.mrb[0].mxu0
    %v532 = vadd.f32 0.0, %v531
    %v533 = vpop.f32.mrb[0].mxu0
    %534 = vdwg.mxu0
    %535 = vrot.lane.b32.xlu0 %v125, 112
    %v536 = vpop.permute.xlu0 %535
    %537 = vrot.lane.b32.xlu0 %v130, 112
    %v538 = vpop.permute.xlu0 %537
    %539 = vrot.lane.b32.xlu0 %v125, 80
    %v540 = vpop.permute.xlu0 %539
    %541 = vrot.lane.b32.xlu0 %v130, 80
    %v542 = vpop.permute.xlu0 %541
    %v543 = vsel %vm141, %v536, 0
    %v545 = vsel %vm141, %v538, 0
    %v547 = vsel %vm141, %v540, 0
    %v549 = vsel %vm141, %v542, 0
    %551 = vmatprep.subr.mxu0 0.0
    %552 = vmatpush1.xpose.msra.mxu0 %v547
    %553 = vmatprep.subr.mxu0 0.0
    %554 = vmatpush1.xpose.msra.mxu0 %v549
    %555 = vmatprep.subr.mxu0 0.0
    %556 = vmatpush1.xpose.msra.mxu0 0.0
    %557 = vmatprep.subr.mxu0 0.0
    %558 = vmatpush1.xpose.msra.mxu0 0.0
    %559 = vmatprep.subr.mxu0 0.0
    %560 = vmatpush1.xpose.msra.mxu0 0.0
    %561 = vmatprep.subr.mxu0 0.0
    %562 = vmatpush1.xpose.msra.mxu0 0.0
    %563 = vmatprep.subr.mxu0 0.0
    %564 = vmatpush1.xpose.msra.mxu0 0.0
    %565 = vmatprep.subr.mxu0 0.0
    %566 = vmatpush1.xpose.msra.mxu0 0.0
    %567 = vmatprep.subr.mxu0 0.0
    %568 = vmatpush1.xpose.msra.mxu0 0.0
    %569 = vmatprep.subr.mxu0 0.0
    %570 = vmatpush1.xpose.msra.mxu0 0.0
    %571 = vmatprep.subr.mxu0 0.0
    %572 = vmatpush1.xpose.msra.mxu0 0.0
    %573 = vmatprep.subr.mxu0 0.0
    %574 = vmatpush1.xpose.msra.mxu0 0.0
    %575 = vmatprep.subr.mxu0 0.0
    %576 = vmatpush1.xpose.msra.mxu0 0.0
    %577 = vmatprep.subr.mxu0 0.0
    %578 = vmatpush1.xpose.msra.mxu0 0.0
    %579 = vmatprep.subr.mxu0 0.0
    %580 = vmatpush1.xpose.msra.mxu0 0.0
    %581 = vmatprep.subr.mxu0 0.0
    %582 = vmatpush1.xpose.msra.mxu0 0.0
    %583 = vmatprep.subr.mxu0 0.0
    %584 = vmatpush1.xpose.msra.mxu0 0.0
    %585 = vmatprep.subr.mxu0 0.0
    %586 = vmatpush1.xpose.msra.mxu0 0.0
    %587 = vmatprep.subr.mxu0 0.0
    %588 = vmatpush1.xpose.msra.mxu0 0.0
    %589 = vmatprep.subr.mxu0 0.0
    %590 = vmatpush1.xpose.msra.mxu0 0.0
    %591 = vmatprep.subr.mxu0 0.0
    %592 = vmatpush1.xpose.msra.mxu0 0.0
    %593 = vmatprep.subr.mxu0 0.0
    %594 = vmatpush1.xpose.msra.mxu0 0.0
    %595 = vmatprep.subr.mxu0 0.0
    %596 = vmatpush1.xpose.msra.mxu0 0.0
    %597 = vmatprep.subr.mxu0 0.0
    %598 = vmatpush1.xpose.msra.mxu0 0.0
    %599 = vmatprep.subr.mxu0 0.0
    %600 = vmatpush1.xpose.msra.mxu0 0.0
    %601 = vmatprep.subr.mxu0 0.0
    %602 = vmatpush1.xpose.msra.mxu0 0.0
    %603 = vmatprep.subr.mxu0 0.0
    %604 = vmatpush1.xpose.msra.mxu0 0.0
    %605 = vmatprep.subr.mxu0 0.0
    %606 = vmatpush1.xpose.msra.mxu0 0.0
    %607 = vmatprep.subr.mxu0 0.0
    %608 = vmatpush1.xpose.msra.mxu0 0.0
    %609 = vmatprep.subr.mxu0 0.0
    %610 = vmatpush1.xpose.msra.mxu0 0.0
    %611 = vmatprep.subr.mxu0 0.0
    %612 = vmatpush1.xpose.msra.mxu0 0.0
    %613 = vmatprep.subr.mxu0 0.0
    %614 = vmatpush1.xpose.msra.mxu0 0.0
    %615 = vmatprep.mubr.f32.mxu0 0.0
    %616 = vmatmul.mubr.f32.gmra.mrb[0].mxu0 %v543
    %v617 = vpop.f32.mrb[0].mxu0
    %v618 = vadd.f32 %v133, %v617
    %v619 = vpop.f32.mrb[0].mxu0
    %620 = vmatprep.mubr.f32.mxu0 0.0
    %621 = vmatmul.mubr.f32.gmra.mrb[0].mxu0 %v545
    %v622 = vpop.f32.mrb[0].mxu0
    %v623 = vadd.f32 %v134, %v622
    %v624 = vpop.f32.mrb[0].mxu0
    %625 = vdwg.mxu0
    %v626 = vsel %vm225, %v618, -inf
    %627 = vmax.xlane.f32.xlu0 %v626
    %v628 = vpop.xlane.xlu0 %627
    %v629 = vsel %vm225, %v623, -inf
    %630 = vmax.xlane.f32.xlu0 %v629
    %v631 = vpop.xlane.xlu0 %630
    %v632 = vsub.f32 %v618, %v628
    %v633 = vsub.f32 %v623, %v631
    %v634 = vmul.f32 %v632, 1.442695
    %v635 = vpow.pop %v634
    %v636 = vmul.f32 %v633, 1.442695
    %v637 = vpow.pop %v636
    %v638 = vsel %vm225, %v635, 0.0
    %639 = vadd.xlane.f32.xlu0 %v638
    %v640 = vpop.xlane.xlu0 %639
    %v641 = vsel %vm225, %v637, 0.0
    %642 = vadd.xlane.f32.xlu0 %v641
    %v643 = vpop.xlane.xlu0 %642
    %v644 = vrcp.pop %v640
    %v645 = vrcp.pop %v643
    %v646 = vmul.f32 %v635, %v644
    %v647 = vmul.f32 %v637, %v645
    %648 = vrot.lane.b32.xlu0 %v125, 48
    %v649 = vpop.permute.xlu0 %648
    %650 = vrot.lane.b32.xlu0 %v130, 48
    %v651 = vpop.permute.xlu0 %650
    %v655 = vsel %vm225, %v646, 0
    %v658 = vsel %vm225, %v647, 0
    %660 = vmatprep.subr.mxu0 0.0
    %661 = vmatpush1.msra.mxu0 %v649
    %662 = vmatprep.subr.mxu0 0.0
    %663 = vmatpush1.msra.mxu0 %v651
    %664 = vmatprep.subr.mxu0 0.0
    %665 = vmatpush1.msra.mxu0 0.0
    %666 = vmatprep.subr.mxu0 0.0
    %667 = vmatpush1.msra.mxu0 0.0
    %668 = vmatprep.subr.mxu0 0.0
    %669 = vmatpush1.msra.mxu0 0.0
    %670 = vmatprep.subr.mxu0 0.0
    %671 = vmatpush1.msra.mxu0 0.0
    %672 = vmatprep.subr.mxu0 0.0
    %673 = vmatpush1.msra.mxu0 0.0
    %674 = vmatprep.subr.mxu0 0.0
    %675 = vmatpush1.msra.mxu0 0.0
    %676 = vmatprep.subr.mxu0 0.0
    %677 = vmatpush1.msra.mxu0 0.0
    %678 = vmatprep.subr.mxu0 0.0
    %679 = vmatpush1.msra.mxu0 0.0
    %680 = vmatprep.subr.mxu0 0.0
    %681 = vmatpush1.msra.mxu0 0.0
    %682 = vmatprep.subr.mxu0 0.0
    %683 = vmatpush1.msra.mxu0 0.0
    %684 = vmatprep.subr.mxu0 0.0
    %685 = vmatpush1.msra.mxu0 0.0
    %686 = vmatprep.subr.mxu0 0.0
    %687 = vmatpush1.msra.mxu0 0.0
    %688 = vmatprep.subr.mxu0 0.0
    %689 = vmatpush1.msra.mxu0 0.0
    %690 = vmatprep.subr.mxu0 0.0
    %691 = vmatpush1.msra.mxu0 0.0
    %692 = vmatprep.subr.mxu0 0.0
    %693 = vmatpush1.msra.mxu0 0.0
    %694 = vmatprep.subr.mxu0 0.0
    %695 = vmatpush1.msra.mxu0 0.0
    %696 = vmatprep.subr.mxu0 0.0
    %697 = vmatpush1.msra.mxu0 0.0
    %698 = vmatprep.subr.mxu0 0.0
    %699 = vmatpush1.msra.mxu0 0.0
    %700 = vmatprep.subr.mxu0 0.0
    %701 = vmatpush1.msra.mxu0 0.0
    %702 = vmatprep.subr.mxu0 0.0
    %703 = vmatpush1.msra.mxu0 0.0
    %704 = vmatprep.subr.mxu0 0.0
    %705 = vmatpush1.msra.mxu0 0.0
    %706 = vmatprep.subr.mxu0 0.0
    %707 = vmatpush1.msra.mxu0 0.0
    %708 = vmatprep.subr.mxu0 0.0
    %709 = vmatpush1.msra.mxu0 0.0
    %710 = vmatprep.subr.mxu0 0.0
    %711 = vmatpush1.msra.mxu0 0.0
    %712 = vmatprep.subr.mxu0 0.0
    %713 = vmatpush1.msra.mxu0 0.0
    %714 = vmatprep.subr.mxu0 0.0
    %715 = vmatpush1.msra.mxu0 0.0
    %716 = vmatprep.subr.mxu0 0.0
    %717 = vmatpush1.msra.mxu0 0.0
    %718 = vmatprep.subr.mxu0 0.0
    %719 = vmatpush1.msra.mxu0 0.0
    %720 = vmatprep.subr.mxu0 0.0
    %721 = vmatpush1.msra.mxu0 0.0
    %722 = vmatprep.subr.mxu0 0.0
    %723 = vmatpush1.msra.mxu0 0.0
    %724 = vmatprep.mubr.f32.mxu0 0.0
    %725 = vmatmul.mubr.f32.gmra.mrb[0].mxu0 %v655
    %v726 = vpop.f32.mrb[0].mxu0
    %v727 = vadd.f32 0.0, %v726
    %v728 = vpop.f32.mrb[0].mxu0
    %729 = vmatprep.mubr.f32.mxu0 0.0
    %730 = vmatmul.mubr.f32.gmra.mrb[0].mxu0 %v658
    %v731 = vpop.f32.mrb[0].mxu0
    %v732 = vadd.f32 0.0, %v731
    %v733 = vpop.f32.mrb[0].mxu0
    %734 = vdwg.mxu0
    %735 = vrot.lane.b32.xlu0 %v125, 104
    %v736 = vpop.permute.xlu0 %735
    %737 = vrot.lane.b32.xlu0 %v130, 104
    %v738 = vpop.permute.xlu0 %737
    %739 = vrot.lane.b32.xlu0 %v125, 72
    %v740 = vpop.permute.xlu0 %739
    %741 = vrot.lane.b32.xlu0 %v130, 72
    %v742 = vpop.permute.xlu0 %741
    %v743 = vsel %vm141, %v736, 0
    %v745 = vsel %vm141, %v738, 0
    %v747 = vsel %vm141, %v740, 0
    %v749 = vsel %vm141, %v742, 0
    %751 = vmatprep.subr.mxu0 0.0
    %752 = vmatpush1.xpose.msra.mxu0 %v747
    %753 = vmatprep.subr.mxu0 0.0
    %754 = vmatpush1.xpose.msra.mxu0 %v749
    %755 = vmatprep.subr.mxu0 0.0
    %756 = vmatpush1.xpose.msra.mxu0 0.0
    %757 = vmatprep.subr.mxu0 0.0
    %758 = vmatpush1.xpose.msra.mxu0 0.0
    %759 = vmatprep.subr.mxu0 0.0
    %760 = vmatpush1.xpose.msra.mxu0 0.0
    %761 = vmatprep.subr.mxu0 0.0
    %762 = vmatpush1.xpose.msra.mxu0 0.0
    %763 = vmatprep.subr.mxu0 0.0
    %764 = vmatpush1.xpose.msra.mxu0 0.0
    %765 = vmatprep.subr.mxu0 0.0
    %766 = vmatpush1.xpose.msra.mxu0 0.0
    %767 = vmatprep.subr.mxu0 0.0
    %768 = vmatpush1.xpose.msra.mxu0 0.0
    %769 = vmatprep.subr.mxu0 0.0
    %770 = vmatpush1.xpose.msra.mxu0 0.0
    %771 = vmatprep.subr.mxu0 0.0
    %772 = vmatpush1.xpose.msra.mxu0 0.0
    %773 = vmatprep.subr.mxu0 0.0
    %774 = vmatpush1.xpose.msra.mxu0 0.0
    %775 = vmatprep.subr.mxu0 0.0
    %776 = vmatpush1.xpose.msra.mxu0 0.0
    %777 = vmatprep.subr.mxu0 0.0
    %778 = vmatpush1.xpose.msra.mxu0 0.0
    %779 = vmatprep.subr.mxu0 0.0
    %780 = vmatpush1.xpose.msra.mxu0 0.0
    %781 = vmatprep.subr.mxu0 0.0
    %782 = vmatpush1.xpose.msra.mxu0 0.0
    %783 = vmatprep.subr.mxu0 0.0
    %784 = vmatpush1.xpose.msra.mxu0 0.0
    %785 = vmatprep.subr.mxu0 0.0
    %786 = vmatpush1.xpose.msra.mxu0 0.0
    %787 = vmatprep.subr.mxu0 0.0
    %788 = vmatpush1.xpose.msra.mxu0 0.0
    %789 = vmatprep.subr.mxu0 0.0
    %790 = vmatpush1.xpose.msra.mxu0 0.0
    %791 = vmatprep.subr.mxu0 0.0
    %792 = vmatpush1.xpose.msra.mxu0 0.0
    %793 = vmatprep.subr.mxu0 0.0
    %794 = vmatpush1.xpose.msra.mxu0 0.0
    %795 = vmatprep.subr.mxu0 0.0
    %796 = vmatpush1.xpose.msra.mxu0 0.0
    %797 = vmatprep.subr.mxu0 0.0
    %798 = vmatpush1.xpose.msra.mxu0 0.0
    %799 = vmatprep.subr.mxu0 0.0
    %800 = vmatpush1.xpose.msra.mxu0 0.0
    %801 = vmatprep.subr.mxu0 0.0
    %802 = vmatpush1.xpose.msra.mxu0 0.0
    %803 = vmatprep.subr.mxu0 0.0
    %804 = vmatpush1.xpose.msra.mxu0 0.0
    %805 = vmatprep.subr.mxu0 0.0
    %806 = vmatpush1.xpose.msra.mxu0 0.0
    %807 = vmatprep.subr.mxu0 0.0
    %808 = vmatpush1.xpose.msra.mxu0 0.0
    %809 = vmatprep.subr.mxu0 0.0
    %810 = vmatpush1.xpose.msra.mxu0 0.0
    %811 = vmatprep.subr.mxu0 0.0
    %812 = vmatpush1.xpose.msra.mxu0 0.0
    %813 = vmatprep.subr.mxu0 0.0
    %814 = vmatpush1.xpose.msra.mxu0 0.0
    %815 = vmatprep.mubr.f32.mxu0 0.0
    %816 = vmatmul.mubr.f32.gmra.mrb[0].mxu0 %v743
    %v817 = vpop.f32.mrb[0].mxu0
    %v818 = vadd.f32 %v133, %v817
    %v819 = vpop.f32.mrb[0].mxu0
    %820 = vmatprep.mubr.f32.mxu0 0.0
    %821 = vmatmul.mubr.f32.gmra.mrb[0].mxu0 %v745
    %v822 = vpop.f32.mrb[0].mxu0
    %v823 = vadd.f32 %v134, %v822
    %v824 = vpop.f32.mrb[0].mxu0
    %825 = vdwg.mxu0
    %v826 = vsel %vm225, %v818, -inf
    %827 = vmax.xlane.f32.xlu0 %v826
    %v828 = vpop.xlane.xlu0 %827
    %v829 = vsel %vm225, %v823, -inf
    %830 = vmax.xlane.f32.xlu0 %v829
    %v831 = vpop.xlane.xlu0 %830
    %v832 = vsub.f32 %v818, %v828
    %v833 = vsub.f32 %v823, %v831
    %v834 = vmul.f32 %v832, 1.442695
    %v835 = vpow.pop %v834
    %v836 = vmul.f32 %v833, 1.442695
    %v837 = vpow.pop %v836
    %v838 = vsel %vm225, %v835, 0.0
    %839 = vadd.xlane.f32.xlu0 %v838
    %v840 = vpop.xlane.xlu0 %839
    %v841 = vsel %vm225, %v837, 0.0
    %842 = vadd.xlane.f32.xlu0 %v841
    %v843 = vpop.xlane.xlu0 %842
    %v844 = vrcp.pop %v840
    %v845 = vrcp.pop %v843
    %v846 = vmul.f32 %v835, %v844
    %v847 = vmul.f32 %v837, %v845
    %848 = vrot.lane.b32.xlu0 %v125, 40
    %v849 = vpop.permute.xlu0 %848
    %850 = vrot.lane.b32.xlu0 %v130, 40
    %v851 = vpop.permute.xlu0 %850
    %v855 = vsel %vm225, %v846, 0
    %v858 = vsel %vm225, %v847, 0
    %860 = vmatprep.subr.mxu0 0.0
    %861 = vmatpush1.msra.mxu0 %v849
    %862 = vmatprep.subr.mxu0 0.0
    %863 = vmatpush1.msra.mxu0 %v851
    %864 = vmatprep.subr.mxu0 0.0
    %865 = vmatpush1.msra.mxu0 0.0
    %866 = vmatprep.subr.mxu0 0.0
    %867 = vmatpush1.msra.mxu0 0.0
    %868 = vmatprep.subr.mxu0 0.0
    %869 = vmatpush1.msra.mxu0 0.0
    %870 = vmatprep.subr.mxu0 0.0
    %871 = vmatpush1.msra.mxu0 0.0
    %872 = vmatprep.subr.mxu0 0.0
    %873 = vmatpush1.msra.mxu0 0.0
    %874 = vmatprep.subr.mxu0 0.0
    %875 = vmatpush1.msra.mxu0 0.0
    %876 = vmatprep.subr.mxu0 0.0
    %877 = vmatpush1.msra.mxu0 0.0
    %878 = vmatprep.subr.mxu0 0.0
    %879 = vmatpush1.msra.mxu0 0.0
    %880 = vmatprep.subr.mxu0 0.0
    %881 = vmatpush1.msra.mxu0 0.0
    %882 = vmatprep.subr.mxu0 0.0
    %883 = vmatpush1.msra.mxu0 0.0
    %884 = vmatprep.subr.mxu0 0.0
    %885 = vmatpush1.msra.mxu0 0.0
    %886 = vmatprep.subr.mxu0 0.0
    %887 = vmatpush1.msra.mxu0 0.0
    %888 = vmatprep.subr.mxu0 0.0
    %889 = vmatpush1.msra.mxu0 0.0
    %890 = vmatprep.subr.mxu0 0.0
    %891 = vmatpush1.msra.mxu0 0.0
    %892 = vmatprep.subr.mxu0 0.0
    %893 = vmatpush1.msra.mxu0 0.0
    %894 = vmatprep.subr.mxu0 0.0
    %895 = vmatpush1.msra.mxu0 0.0
    %896 = vmatprep.subr.mxu0 0.0
    %897 = vmatpush1.msra.mxu0 0.0
    %898 = vmatprep.subr.mxu0 0.0
    %899 = vmatpush1.msra.mxu0 0.0
    %900 = vmatprep.subr.mxu0 0.0
    %901 = vmatpush1.msra.mxu0 0.0
    %902 = vmatprep.subr.mxu0 0.0
    %903 = vmatpush1.msra.mxu0 0.0
    %904 = vmatprep.subr.mxu0 0.0
    %905 = vmatpush1.msra.mxu0 0.0
    %906 = vmatprep.subr.mxu0 0.0
    %907 = vmatpush1.msra.mxu0 0.0
    %908 = vmatprep.subr.mxu0 0.0
    %909 = vmatpush1.msra.mxu0 0.0
    %910 = vmatprep.subr.mxu0 0.0
    %911 = vmatpush1.msra.mxu0 0.0
    %912 = vmatprep.subr.mxu0 0.0
    %913 = vmatpush1.msra.mxu0 0.0
    %914 = vmatprep.subr.mxu0 0.0
    %915 = vmatpush1.msra.mxu0 0.0
    %916 = vmatprep.subr.mxu0 0.0
    %917 = vmatpush1.msra.mxu0 0.0
    %918 = vmatprep.subr.mxu0 0.0
    %919 = vmatpush1.msra.mxu0 0.0
    %920 = vmatprep.subr.mxu0 0.0
    %921 = vmatpush1.msra.mxu0 0.0
    %922 = vmatprep.subr.mxu0 0.0
    %923 = vmatpush1.msra.mxu0 0.0
    %924 = vmatprep.mubr.f32.mxu0 0.0
    %925 = vmatmul.mubr.f32.gmra.mrb[0].mxu0 %v855
    %v926 = vpop.f32.mrb[0].mxu0
    %v927 = vadd.f32 0.0, %v926
    %v928 = vpop.f32.mrb[0].mxu0
    %929 = vmatprep.mubr.f32.mxu0 0.0
    %930 = vmatmul.mubr.f32.gmra.mrb[0].mxu0 %v858
    %v931 = vpop.f32.mrb[0].mxu0
    %v932 = vadd.f32 0.0, %v931
    %v933 = vpop.f32.mrb[0].mxu0
    %934 = vdwg.mxu0
    %937 = vrot.lane.b32.xlu0 %v527, 8
    %v938 = vpop.permute.xlu0 %937
    %939 = vrot.lane.b32.xlu0 %v532, 8
    %v940 = vpop.permute.xlu0 %939
    %945 = vrot.lane.b32.xlu0 %v727, 16
    %v946 = vpop.permute.xlu0 %945
    %947 = vrot.lane.b32.xlu0 %v732, 16
    %v948 = vpop.permute.xlu0 %947
    %953 = vrot.lane.b32.xlu0 %v927, 24
    %v954 = vpop.permute.xlu0 %953
    %955 = vrot.lane.b32.xlu0 %v932, 24
    %v956 = vpop.permute.xlu0 %955
    %v959 = vsel %vm141, %v327, %v938
    %v960 = vsel %vm141, %v332, %v940
    %v961 = vsel %vm225, %v959, %v946
    %v962 = vsel %vm225, %v960, %v948
    %vm963 = vcmask 195584
    %v964 = vsel %vm963, %v961, %v954
    %v965 = vsel %vm963, %v962, %v956
    %v966 = vld [vmem:[#allocation5 + $0x20] sm:$0xff]
    %v967 = vld [vmem:[#allocation5 + $0x28] sm:$0xff]
    %v968 = vld [vmem:[#allocation5 + $0x30] sm:$0xff]
    %v969 = vld [vmem:[#allocation5 + $0x38] sm:$0xff]
    %v970 = vld [vmem:[#allocation5 + $0xc1] sm:$0x1]
    %v971 = vlaneseq
    %v972 = vshrl.u32 %v971, 7
    %v973 = vsub.s32 0, %v972
    %v974 = vrot.slane %v970, %v973
    %v976 = vsel %vm51, %v964, 0
    %v979 = vsel %vm51, %v965, 0
    %981 = vmatprep.subr.mxu0 0.0
    %982 = vmatpush1.msra.mxu0 %v966
    %983 = vmatprep.subr.mxu0 0.0
    %984 = vmatpush1.msra.mxu0 %v967
    %985 = vmatprep.subr.mxu0 0.0
    %986 = vmatpush1.msra.mxu0 %v968
    %987 = vmatprep.subr.mxu0 0.0
    %988 = vmatpush1.msra.mxu0 %v969
    %989 = vmatprep.subr.mxu0 0.0
    %990 = vmatpush1.msra.mxu0 0.0
    %991 = vmatprep.subr.mxu0 0.0
    %992 = vmatpush1.msra.mxu0 0.0
    %993 = vmatprep.subr.mxu0 0.0
    %994 = vmatpush1.msra.mxu0 0.0
    %995 = vmatprep.subr.mxu0 0.0
    %996 = vmatpush1.msra.mxu0 0.0
    %997 = vmatprep.subr.mxu0 0.0
    %998 = vmatpush1.msra.mxu0 0.0
    %999 = vmatprep.subr.mxu0 0.0
    %1000 = vmatpush1.msra.mxu0 0.0
    %1001 = vmatprep.subr.mxu0 0.0
    %1002 = vmatpush1.msra.mxu0 0.0
    %1003 = vmatprep.subr.mxu0 0.0
    %1004 = vmatpush1.msra.mxu0 0.0
    %1005 = vmatprep.subr.mxu0 0.0
    %1006 = vmatpush1.msra.mxu0 0.0
    %1007 = vmatprep.subr.mxu0 0.0
    %1008 = vmatpush1.msra.mxu0 0.0
    %1009 = vmatprep.subr.mxu0 0.0
    %1010 = vmatpush1.msra.mxu0 0.0
    %1011 = vmatprep.subr.mxu0 0.0
    %1012 = vmatpush1.msra.mxu0 0.0
    %1013 = vmatprep.subr.mxu0 0.0
    %1014 = vmatpush1.msra.mxu0 0.0
    %1015 = vmatprep.subr.mxu0 0.0
    %1016 = vmatpush1.msra.mxu0 0.0
    %1017 = vmatprep.subr.mxu0 0.0
    %1018 = vmatpush1.msra.mxu0 0.0
    %1019 = vmatprep.subr.mxu0 0.0
    %1020 = vmatpush1.msra.mxu0 0.0
    %1021 = vmatprep.subr.mxu0 0.0
    %1022 = vmatpush1.msra.mxu0 0.0
    %1023 = vmatprep.subr.mxu0 0.0
    %1024 = vmatpush1.msra.mxu0 0.0
    %1025 = vmatprep.subr.mxu0 0.0
    %1026 = vmatpush1.msra.mxu0 0.0
    %1027 = vmatprep.subr.mxu0 0.0
    %1028 = vmatpush1.msra.mxu0 0.0
    %1029 = vmatprep.subr.mxu0 0.0
    %1030 = vmatpush1.msra.mxu0 0.0
    %1031 = vmatprep.subr.mxu0 0.0
    %1032 = vmatpush1.msra.mxu0 0.0
    %1033 = vmatprep.subr.mxu0 0.0
    %1034 = vmatpush1.msra.mxu0 0.0
    %1035 = vmatprep.subr.mxu0 0.0
    %1036 = vmatpush1.msra.mxu0 0.0
    %1037 = vmatprep.subr.mxu0 0.0
    %1038 = vmatpush1.msra.mxu0 0.0
    %1039 = vmatprep.subr.mxu0 0.0
    %1040 = vmatpush1.msra.mxu0 0.0
    %1041 = vmatprep.subr.mxu0 0.0
    %1042 = vmatpush1.msra.mxu0 0.0
    %1043 = vmatprep.subr.mxu0 0.0
    %1044 = vmatpush1.msra.mxu0 0.0
    %1045 = vmatprep.mubr.f32.mxu0 0.0
    %1046 = vmatmul.mubr.f32.gmra.mrb[0].mxu0 %v976
    %v1047 = vpop.f32.mrb[0].mxu0
    %v1048 = vadd.f32 %v974, %v1047
    %v1049 = vpop.f32.mrb[0].mxu0
    %1050 = vmatprep.mubr.f32.mxu0 0.0
    %1051 = vmatmul.mubr.f32.gmra.mrb[0].mxu0 %v979
    %v1052 = vpop.f32.mrb[0].mxu0
    %v1053 = vadd.f32 %v974, %v1052
    %v1054 = vpop.f32.mrb[0].mxu0
    %1055 = vdwg.mxu0
    %v1056 = vadd.f32 %v1048, %v40
    %v1057 = vadd.f32 %v1053, %v41
    %v1058 = vld [vmem:[#allocation5 + $0xc5] sm:$0x1]
    %v1059 = vld [vmem:[#allocation5 + $0xc6] sm:$0x1]
    %v1060 = vsel %vm51, %v1056, 0.0
    %1061 = vadd.xlane.f32.xlu0 %v1060
    %v1062 = vpop.xlane.xlu0 %1061
    %v1063 = vsel %vm51, %v1057, 0.0
    %1064 = vadd.xlane.f32.xlu0 %v1063
    %v1065 = vpop.xlane.xlu0 %1064
    %v1066 = vrcp.pop 32.0
    %v1067 = vmul.f32 %v1062, %v1066
    %v1068 = vmul.f32 %v1065, %v1066
    %v1069 = vmul.f32 %v1056, %v1056
    %v1070 = vmul.f32 %v1057, %v1057
    %v1071 = vsel %vm51, %v1069, 0.0
    %1072 = vadd.xlane.f32.xlu0 %v1071
    %v1073 = vpop.xlane.xlu0 %1072
    %v1074 = vsel %vm51, %v1070, 0.0
    %1075 = vadd.xlane.f32.xlu0 %v1074
    %v1076 = vpop.xlane.xlu0 %1075
    %v1077 = vmul.f32 %v1073, %v1066
    %v1078 = vmul.f32 %v1076, %v1066
    %v1079 = vmul.f32 %v1067, %v1067
    %v1080 = vmul.f32 %v1068, %v1068
    %v1081 = vsub.f32 %v1077, %v1079
    %v1082 = vsub.f32 %v1078, %v1080
    %v1083 = vsub.f32 %v1056, %v1067
    %v1084 = vsub.f32 %v1057, %v1068
    %v1085 = vadd.f32 %v1081, 1e-05
    %v1086 = vadd.f32 %v1082, 1e-05
    %v1087 = vrsqrt.pop %v1085
    %v1088 = vrsqrt.pop %v1086
    %v1089 = vmul.f32 %v1083, %v1087
    %v1090 = vmul.f32 %v1084, %v1088
    %v1091 = vlaneseq
    %v1092 = vshrl.u32 %v1091, 7
    %v1093 = vsub.s32 0, %v1092
    %v1094 = vrot.slane %v1058, %v1093
    %v1095 = vmul.f32 %v1089, %v1094
    %v1096 = vmul.f32 %v1090, %v1094
    %v1097 = vlaneseq
    %v1098 = vshrl.u32 %v1097, 7
    %v1099 = vsub.s32 0, %v1098
    %v1100 = vrot.slane %v1059, %v1099
    %v1101 = vadd.f32 %v1095, %v1100
    %v1102 = vadd.f32 %v1096, %v1100
    %v1103 = vld [vmem:[#allocation5 + $0x40] sm:$0xff]
    %v1104 = vld [vmem:[#allocation5 + $0x48] sm:$0xff]
    %v1105 = vld [vmem:[#allocation5 + $0x50] sm:$0xff]
    %v1106 = vld [vmem:[#allocation5 + $0x58] sm:$0xff]
    %v1107 = vld [vmem:[#allocation5 + $0xc2] sm:$0x1]
    %v1108 = vlaneseq
    %v1109 = vshrl.u32 %v1108, 7
    %v1110 = vsub.s32 0, %v1109
    %v1111 = vrot.slane %v1107, %v1110
    %v1113 = vsel %vm51, %v1101, 0
    %v1116 = vsel %vm51, %v1102, 0
    %1118 = vmatprep.subr.mxu0 0.0
    %1119 = vmatpush1.msra.mxu0 %v1103
    %1120 = vmatprep.subr.mxu0 0.0
    %1121 = vmatpush1.msra.mxu0 %v1104
    %1122 = vmatprep.subr.mxu0 0.0
    %1123 = vmatpush1.msra.mxu0 %v1105
    %1124 = vmatprep.subr.mxu0 0.0
    %1125 = vmatpush1.msra.mxu0 %v1106
    %1126 = vmatprep.subr.mxu0 0.0
    %1127 = vmatpush1.msra.mxu0 0.0
    %1128 = vmatprep.subr.mxu0 0.0
    %1129 = vmatpush1.msra.mxu0 0.0
    %1130 = vmatprep.subr.mxu0 0.0
    %1131 = vmatpush1.msra.mxu0 0.0
    %1132 = vmatprep.subr.mxu0 0.0
    %1133 = vmatpush1.msra.mxu0 0.0
    %1134 = vmatprep.subr.mxu0 0.0
    %1135 = vmatpush1.msra.mxu0 0.0
    %1136 = vmatprep.subr.mxu0 0.0
    %1137 = vmatpush1.msra.mxu0 0.0
    %1138 = vmatprep.subr.mxu0 0.0
    %1139 = vmatpush1.msra.mxu0 0.0
    %1140 = vmatprep.subr.mxu0 0.0
    %1141 = vmatpush1.msra.mxu0 0.0
    %1142 = vmatprep.subr.mxu0 0.0
    %1143 = vmatpush1.msra.mxu0 0.0
    %1144 = vmatprep.subr.mxu0 0.0
    %1145 = vmatpush1.msra.mxu0 0.0
    %1146 = vmatprep.subr.mxu0 0.0
    %1147 = vmatpush1.msra.mxu0 0.0
    %1148 = vmatprep.subr.mxu0 0.0
    %1149 = vmatpush1.msra.mxu0 0.0
    %1150 = vmatprep.subr.mxu0 0.0
    %1151 = vmatpush1.msra.mxu0 0.0
    %1152 = vmatprep.subr.mxu0 0.0
    %1153 = vmatpush1.msra.mxu0 0.0
    %1154 = vmatprep.subr.mxu0 0.0
    %1155 = vmatpush1.msra.mxu0 0.0
    %1156 = vmatprep.subr.mxu0 0.0
    %1157 = vmatpush1.msra.mxu0 0.0
    %1158 = vmatprep.subr.mxu0 0.0
    %1159 = vmatpush1.msra.mxu0 0.0
    %1160 = vmatprep.subr.mxu0 0.0
    %1161 = vmatpush1.msra.mxu0 0.0
    %1162 = vmatprep.subr.mxu0 0.0
    %1163 = vmatpush1.msra.mxu0 0.0
    %1164 = vmatprep.subr.mxu0 0.0
    %1165 = vmatpush1.msra.mxu0 0.0
    %1166 = vmatprep.subr.mxu0 0.0
    %1167 = vmatpush1.msra.mxu0 0.0
    %1168 = vmatprep.subr.mxu0 0.0
    %1169 = vmatpush1.msra.mxu0 0.0
    %1170 = vmatprep.subr.mxu0 0.0
    %1171 = vmatpush1.msra.mxu0 0.0
    %1172 = vmatprep.subr.mxu0 0.0
    %1173 = vmatpush1.msra.mxu0 0.0
    %1174 = vmatprep.subr.mxu0 0.0
    %1175 = vmatpush1.msra.mxu0 0.0
    %1176 = vmatprep.subr.mxu0 0.0
    %1177 = vmatpush1.msra.mxu0 0.0
    %1178 = vmatprep.subr.mxu0 0.0
    %1179 = vmatpush1.msra.mxu0 0.0
    %1180 = vmatprep.subr.mxu0 0.0
    %1181 = vmatpush1.msra.mxu0 0.0
    %1182 = vmatprep.mubr.f32.mxu0 0.0
    %1183 = vmatmul.mubr.f32.gmra.mrb[0].mxu0 %v1113
    %v1184 = vpop.f32.mrb[0].mxu0
    %v1185 = vadd.f32 %v1111, %v1184
    %v1186 = vpop.f32.mrb[0].mxu0
    %1187 = vmatprep.mubr.f32.mxu0 0.0
    %1188 = vmatmul.mubr.f32.gmra.mrb[0].mxu0 %v1116
    %v1189 = vpop.f32.mrb[0].mxu0
    %v1190 = vadd.f32 %v1111, %v1189
    %v1191 = vpop.f32.mrb[0].mxu0
    %1192 = vdwg.mxu0
    %v1193 = vmax.f32 %v1185, 0.0
    %v1194 = vmax.f32 %v1190, 0.0
    %v1195 = vld [vmem:[#allocation5 + $0x60] sm:$0xff]
    %v1196 = vld [vmem:[#allocation5 + $0x68] sm:$0xff]
    %v1197 = vld [vmem:[#allocation5 + $0x70] sm:$0xff]
    %v1198 = vld [vmem:[#allocation5 + $0x78] sm:$0xff]
    %v1199 = vld [vmem:[#allocation5 + $0x80] sm:$0xff]
    %v1200 = vld [vmem:[#allocation5 + $0x88] sm:$0xff]
    %v1201 = vld [vmem:[#allocation5 + $0x90] sm:$0xff]
    %v1202 = vld [vmem:[#allocation5 + $0x98] sm:$0xff]
    %v1203 = vld [vmem:[#allocation5 + $0xc3] sm:$0x1]
    %v1204 = vlaneseq
    %v1205 = vshrl.u32 %v1204, 7
    %v1206 = vsub.s32 0, %v1205
    %v1207 = vrot.slane %v1203, %v1206
    %vm1208 = vcmask 523264
    %v1210 = vsel %vm1208, %v1193, 0
    %v1213 = vsel %vm1208, %v1194, 0
    %1215 = vmatprep.subr.mxu0 0.0
    %1216 = vmatpush1.msra.mxu0 %v1195
    %1217 = vmatprep.subr.mxu0 0.0
    %1218 = vmatpush1.msra.mxu0 %v1196
    %1219 = vmatprep.subr.mxu0 0.0
    %1220 = vmatpush1.msra.mxu0 %v1197
    %1221 = vmatprep.subr.mxu0 0.0
    %1222 = vmatpush1.msra.mxu0 %v1198
    %1223 = vmatprep.subr.mxu0 0.0
    %1224 = vmatpush1.msra.mxu0 %v1199
    %1225 = vmatprep.subr.mxu0 0.0
    %1226 = vmatpush1.msra.mxu0 %v1200
    %1227 = vmatprep.subr.mxu0 0.0
    %1228 = vmatpush1.msra.mxu0 %v1201
    %1229 = vmatprep.subr.mxu0 0.0
    %1230 = vmatpush1.msra.mxu0 %v1202
    %1231 = vmatprep.subr.mxu0 0.0
    %1232 = vmatpush1.msra.mxu0 0.0
    %1233 = vmatprep.subr.mxu0 0.0
    %1234 = vmatpush1.msra.mxu0 0.0
    %1235 = vmatprep.subr.mxu0 0.0
    %1236 = vmatpush1.msra.mxu0 0.0
    %1237 = vmatprep.subr.mxu0 0.0
    %1238 = vmatpush1.msra.mxu0 0.0
    %1239 = vmatprep.subr.mxu0 0.0
    %1240 = vmatpush1.msra.mxu0 0.0
    %1241 = vmatprep.subr.mxu0 0.0
    %1242 = vmatpush1.msra.mxu0 0.0
    %1243 = vmatprep.subr.mxu0 0.0
    %1244 = vmatpush1.msra.mxu0 0.0
    %1245 = vmatprep.subr.mxu0 0.0
    %1246 = vmatpush1.msra.mxu0 0.0
    %1247 = vmatprep.subr.mxu0 0.0
    %1248 = vmatpush1.msra.mxu0 0.0
    %1249 = vmatprep.subr.mxu0 0.0
    %1250 = vmatpush1.msra.mxu0 0.0
    %1251 = vmatprep.subr.mxu0 0.0
    %1252 = vmatpush1.msra.mxu0 0.0
    %1253 = vmatprep.subr.mxu0 0.0
    %1254 = vmatpush1.msra.mxu0 0.0
    %1255 = vmatprep.subr.mxu0 0.0
    %1256 = vmatpush1.msra.mxu0 0.0
    %1257 = vmatprep.subr.mxu0 0.0
    %1258 = vmatpush1.msra.mxu0 0.0
    %1259 = vmatprep.subr.mxu0 0.0
    %1260 = vmatpush1.msra.mxu0 0.0
    %1261 = vmatprep.subr.mxu0 0.0
    %1262 = vmatpush1.msra.mxu0 0.0
    %1263 = vmatprep.subr.mxu0 0.0
    %1264 = vmatpush1.msra.mxu0 0.0
    %1265 = vmatprep.subr.mxu0 0.0
    %1266 = vmatpush1.msra.mxu0 0.0
    %1267 = vmatprep.subr.mxu0 0.0
    %1268 = vmatpush1.msra.mxu0 0.0
    %1269 = vmatprep.subr.mxu0 0.0
    %1270 = vmatpush1.msra.mxu0 0.0
    %1271 = vmatprep.subr.mxu0 0.0
    %1272 = vmatpush1.msra.mxu0 0.0
    %1273 = vmatprep.subr.mxu0 0.0
    %1274 = vmatpush1.msra.mxu0 0.0
    %1275 = vmatprep.subr.mxu0 0.0
    %1276 = vmatpush1.msra.mxu0 0.0
    %1277 = vmatprep.subr.mxu0 0.0
    %1278 = vmatpush1.msra.mxu0 0.0
    %1279 = vmatprep.mubr.f32.mxu0 0.0
    %1280 = vmatmul.mubr.f32.gmra.mrb[0].mxu0 %v1210
    %v1281 = vpop.f32.mrb[0].mxu0
    %v1282 = vadd.f32 %v1207, %v1281
    %v1283 = vpop.f32.mrb[0].mxu0
    %1284 = vmatprep.mubr.f32.mxu0 0.0
    %1285 = vmatmul.mubr.f32.gmra.mrb[0].mxu0 %v1213
    %v1286 = vpop.f32.mrb[0].mxu0
    %v1287 = vadd.f32 %v1207, %v1286
    %v1288 = vpop.f32.mrb[0].mxu0
    %1289 = vdwg.mxu0
    %v1290 = vmax.f32 %v1282, 0.0
    %v1291 = vmax.f32 %v1287, 0.0
    %v1292 = vld [vmem:[#allocation5 + $0xa0] sm:$0xff]
    %v1293 = vld [vmem:[#allocation5 + $0xa8] sm:$0xff]
    %v1294 = vld [vmem:[#allocation5 + $0xc4] sm:$0x1]
    %v1295 = vlaneseq
    %v1296 = vshrl.u32 %v1295, 7
    %v1297 = vsub.s32 0, %v1296
    %v1298 = vrot.slane %v1294, %v1297
    %v1300 = vsel %vm225, %v1290, 0
    %v1303 = vsel %vm225, %v1291, 0
    %1305 = vmatprep.subr.mxu0 0.0
    %1306 = vmatpush1.msra.mxu0 %v1292
    %1307 = vmatprep.subr.mxu0 0.0
    %1308 = vmatpush1.msra.mxu0 %v1293
    %1309 = vmatprep.subr.mxu0 0.0
    %1310 = vmatpush1.msra.mxu0 0.0
    %1311 = vmatprep.subr.mxu0 0.0
    %1312 = vmatpush1.msra.mxu0 0.0
    %1313 = vmatprep.subr.mxu0 0.0
    %1314 = vmatpush1.msra.mxu0 0.0
    %1315 = vmatprep.subr.mxu0 0.0
    %1316 = vmatpush1.msra.mxu0 0.0
    %1317 = vmatprep.subr.mxu0 0.0
    %1318 = vmatpush1.msra.mxu0 0.0
    %1319 = vmatprep.subr.mxu0 0.0
    %1320 = vmatpush1.msra.mxu0 0.0
    %1321 = vmatprep.subr.mxu0 0.0
    %1322 = vmatpush1.msra.mxu0 0.0
    %1323 = vmatprep.subr.mxu0 0.0
    %1324 = vmatpush1.msra.mxu0 0.0
    %1325 = vmatprep.subr.mxu0 0.0
    %1326 = vmatpush1.msra.mxu0 0.0
    %1327 = vmatprep.subr.mxu0 0.0
    %1328 = vmatpush1.msra.mxu0 0.0
    %1329 = vmatprep.subr.mxu0 0.0
    %1330 = vmatpush1.msra.mxu0 0.0
    %1331 = vmatprep.subr.mxu0 0.0
    %1332 = vmatpush1.msra.mxu0 0.0
    %1333 = vmatprep.subr.mxu0 0.0
    %1334 = vmatpush1.msra.mxu0 0.0
    %1335 = vmatprep.subr.mxu0 0.0
    %1336 = vmatpush1.msra.mxu0 0.0
    %1337 = vmatprep.subr.mxu0 0.0
    %1338 = vmatpush1.msra.mxu0 0.0
    %1339 = vmatprep.subr.mxu0 0.0
    %1340 = vmatpush1.msra.mxu0 0.0
    %1341 = vmatprep.subr.mxu0 0.0
    %1342 = vmatpush1.msra.mxu0 0.0
    %1343 = vmatprep.subr.mxu0 0.0
    %1344 = vmatpush1.msra.mxu0 0.0
    %1345 = vmatprep.subr.mxu0 0.0
    %1346 = vmatpush1.msra.mxu0 0.0
    %1347 = vmatprep.subr.mxu0 0.0
    %1348 = vmatpush1.msra.mxu0 0.0
    %1349 = vmatprep.subr.mxu0 0.0
    %1350 = vmatpush1.msra.mxu0 0.0
    %1351 = vmatprep.subr.mxu0 0.0
    %1352 = vmatpush1.msra.mxu0 0.0
    %1353 = vmatprep.subr.mxu0 0.0
    %1354 = vmatpush1.msra.mxu0 0.0
    %1355 = vmatprep.subr.mxu0 0.0
    %1356 = vmatpush1.msra.mxu0 0.0
    %1357 = vmatprep.subr.mxu0 0.0
    %1358 = vmatpush1.msra.mxu0 0.0
    %1359 = vmatprep.subr.mxu0 0.0
    %1360 = vmatpush1.msra.mxu0 0.0
    %1361 = vmatprep.subr.mxu0 0.0
    %1362 = vmatpush1.msra.mxu0 0.0
    %1363 = vmatprep.subr.mxu0 0.0
    %1364 = vmatpush1.msra.mxu0 0.0
    %1365 = vmatprep.subr.mxu0 0.0
    %1366 = vmatpush1.msra.mxu0 0.0
    %1367 = vmatprep.subr.mxu0 0.0
    %1368 = vmatpush1.msra.mxu0 0.0
    %1369 = vmatprep.mubr.f32.mxu0 0.0
    %1370 = vmatmul.mubr.f32.gmra.mrb[0].mxu0 %v1300
    %v1371 = vpop.f32.mrb[0].mxu0
    %v1372 = vadd.f32 %v1298, %v1371
    %v1373 = vpop.f32.mrb[0].mxu0
    %1374 = vmatprep.mubr.f32.mxu0 0.0
    %1375 = vmatmul.mubr.f32.gmra.mrb[0].mxu0 %v1303
    %v1376 = vpop.f32.mrb[0].mxu0
    %v1377 = vadd.f32 %v1298, %v1376
    %v1378 = vpop.f32.mrb[0].mxu0
    %1379 = vdwg.mxu0
    %v1380 = vadd.f32 %v1372, %v1048
    %v1381 = vadd.f32 %v1377, %v1053
    %v1382 = vld [vmem:[#allocation5 + $0xc7] sm:$0x1]
    %v1383 = vld [vmem:[#allocation5 + $0xc8] sm:$0x1]
    %v1384 = vsel %vm225, %v1380, 0.0
    %1385 = vadd.xlane.f32.xlu0 %v1384
    %v1386 = vpop.xlane.xlu0 %1385
    %v1387 = vsel %vm225, %v1381, 0.0
    %1388 = vadd.xlane.f32.xlu0 %v1387
    %v1389 = vpop.xlane.xlu0 %1388
    %v1390 = vrcp.pop 16.0
    %v1391 = vmul.f32 %v1386, %v1390
    %v1392 = vmul.f32 %v1389, %v1390
    %v1393 = vmul.f32 %v1380, %v1380
    %v1394 = vmul.f32 %v1381, %v1381
    %v1395 = vsel %vm225, %v1393, 0.0
    %1396 = vadd.xlane.f32.xlu0 %v1395
    %v1397 = vpop.xlane.xlu0 %1396
    %v1398 = vsel %vm225, %v1394, 0.0
    %1399 = vadd.xlane.f32.xlu0 %v1398
    %v1400 = vpop.xlane.xlu0 %1399
    %v1401 = vmul.f32 %v1397, %v1390
    %v1402 = vmul.f32 %v1400, %v1390
    %v1403 = vmul.f32 %v1391, %v1391
    %v1404 = vmul.f32 %v1392, %v1392
    %v1405 = vsub.f32 %v1401, %v1403
    %v1406 = vsub.f32 %v1402, %v1404
    %v1407 = vsub.f32 %v1380, %v1391
    %v1408 = vsub.f32 %v1381, %v1392
    %v1409 = vadd.f32 %v1405, 1e-05
    %v1410 = vadd.f32 %v1406, 1e-05
    %v1411 = vrsqrt.pop %v1409
    %v1412 = vrsqrt.pop %v1410
    %v1413 = vmul.f32 %v1407, %v1411
    %v1414 = vmul.f32 %v1408, %v1412
    %v1415 = vlaneseq
    %v1416 = vshrl.u32 %v1415, 7
    %v1417 = vsub.s32 0, %v1416
    %v1418 = vrot.slane %v1382, %v1417
    %v1419 = vmul.f32 %v1413, %v1418
    %v1420 = vmul.f32 %v1414, %v1418
    %v1421 = vlaneseq
    %v1422 = vshrl.u32 %v1421, 7
    %v1423 = vsub.s32 0, %v1422
    %v1424 = vrot.slane %v1383, %v1423
    %v1425 = vadd.f32 %v1419, %v1424
    %v1426 = vadd.f32 %v1420, %v1424
    %1427 = vst.msk [vmem:[#allocation7] sm:$0xff] %vm225, %v1425
    %1428 = vst.msk [vmem:[#allocation7 + $0x8] sm:$0xff] %vm225, %v1426
    // Predicated region
    $region18: #{sent_mha_forward.1} parent=1 // pred_check
      _
    $region19: #{sent_mha_forward.1} parent=1 // pred_check_branch
      %1430 = sbr.rel (0) target = $region21
    $region20: #{sent_mha_forward.1} parent=1 // pred_region
      %s1432 = ssub.s32 256, 256
      %1433 = vsyncadd [#allocation4], %s1432
      %s1434 = sshll.u32 [#allocation7], 4
      %s1435 = int_to_ptr.vmem [resolvable:$true] %s1434
      %1440 = dma.vmem_to_hbm [thread:$0]  %s1435, 256, %s2, [#allocation4], 128, 128, 8
    $region21: #{sent_mha_forward.1} parent=1 // pred_fallthru
      _
    // Predicated region
    $region22: #{sent_mha_forward.1} parent=1 // pred_check
      _
    $region23: #{sent_mha_forward.1} parent=1 // pred_check_branch
      %1442 = sbr.rel (0) target = $region25
    $region24: #{sent_mha_forward.1} parent=1 // pred_region
      %1443 = dma.done [#allocation4], 256
    $region25: #{sent_mha_forward.1} parent=1 // pred_fallthru
      _
    %1444 = vsyncpa [#allocation3], 1
    %1445 = vsyncpa [#allocation6], 1
    %1446 = vsyncpa [#allocation4], 1

</llo_original>
